<compile_context>
chip_gen: v5e
topology: v5e:2x2
jax: 0.10.0
libtpu: 0.0.40
codegen_flags: <defaults>
</compile_context>

<pallas_src>
import functools

import jax
import jax.numpy as jnp
from jax.experimental import pallas as pl
from jax.experimental.pallas import tpu as pltpu

EPS = 1e-5


# ------------------------------ fused kernel ------------------------------- #

def _bottleneck_kernel(*refs, K, stride, pad, H, W, H_out, W_out, se, res):
    refs = list(refs)
    x_ref, w1_ref, b1_ref, wd_ref, b2_ref = refs[:5]
    idx = 5
    if se:
        wse1_ref, wse2_ref = refs[idx], refs[idx + 1]
        idx += 2
    w3_ref, b3_ref, o_ref, y1p_ref = refs[idx:idx + 4]
    idx += 4
    acc_ref = refs[idx] if stride > 1 else None

    in_c = x_ref.shape[-1]
    hid_c = w1_ref.shape[-1]
    out_c = w3_ref.shape[-1]
    HP, WP = H + 2 * pad, W + 2 * pad
    Hs1, Ws1 = HP - K + 1, WP - K + 1        # stride-1 depthwise output size

    # ---- 1x1 expand conv (+ folded BN) + ReLU : MXU matmul ---------------- #
    x2d = x_ref[...].reshape(H * W, in_c)
    y1 = jnp.dot(x2d, w1_ref[...], preferred_element_type=jnp.float32)
    y1 = jnp.maximum(y1 + b1_ref[...], 0.0)

    # ---- stage into halo scratch (zero only the pad-wide border frame; the
    # ---- interior is fully overwritten every step) ------------------------- #
    if pad > 0:
        zrow = jnp.zeros((pad, WP, hid_c), jnp.float32)
        zcol = jnp.zeros((H, pad, hid_c), jnp.float32)
        y1p_ref[0:pad, :, :] = zrow                 # top rows
        y1p_ref[pad + H:HP, :, :] = zrow            # bottom rows
        y1p_ref[pad:pad + H, 0:pad, :] = zcol       # left cols
        y1p_ref[pad:pad + H, pad + W:WP, :] = zcol  # right cols
    y1p_ref[pad:pad + H, pad:pad + W, :] = y1.reshape(H, W, hid_c)

    # ---- depthwise KxK conv (+ folded BN) --------------------------------- #
    wd = wd_ref[...]                         # (K*K, hid_c) loaded once
    acc = jnp.zeros((Hs1, Ws1, hid_c), jnp.float32)
    for kh in range(K):
        for kw in range(K):
            tap = y1p_ref[kh:kh + Hs1, kw:kw + Ws1, :]   # contiguous slices
            acc = acc + tap * wd[kh * K + kw, :]
    if stride > 1:
        # accumulate at stride 1, subsample once with a single strided read
        acc_ref[...] = acc
        acc = acc_ref[pl.ds(0, H_out, stride), pl.ds(0, W_out, stride), :]
    dw = acc + b2_ref[...]                   # (H_out, W_out, hid_c)

    # ---- SE (pool -> FC -> ReLU -> FC -> hsigmoid -> scale), in-register --- #
    if se:
        # 1/(H_out*W_out) is folded into wse1 on host -> plain sum here.
        pooled = jnp.sum(dw.reshape(H_out * W_out, hid_c), axis=0,
                         keepdims=True)                          # (1, hid_c)
        h = jnp.maximum(
            jnp.dot(pooled, wse1_ref[...], preferred_element_type=jnp.float32),
            0.0)
        s = jnp.dot(h, wse2_ref[...], preferred_element_type=jnp.float32)
        s = jnp.clip(s + 3.0, 0.0, 6.0) * (1.0 / 6.0)            # hsigmoid
        dw = dw * s.reshape(1, 1, hid_c)

    # ---- block activation ('r' = ReLU), fused ------------------------------ #
    y2 = jnp.maximum(dw, 0.0)

    # ---- 1x1 project conv (+ folded BN) (+ residual) : MXU matmul ---------- #
    y3 = jnp.dot(y2.reshape(H_out * W_out, hid_c), w3_ref[...],
                 preferred_element_type=jnp.float32)
    y3 = y3 + b3_ref[...]
    if res:
        y3 = y3 + x2d                        # stride == 1 and in_c == out_c
    o_ref[...] = y3.reshape(1, H_out, W_out, out_c)


# ------------------------------ host wrapper ------------------------------- #

def _fold_bn(g, b, m, v):
    scale = g / jnp.sqrt(v + EPS)
    return scale, b - m * scale


def bottleneck_forward(x_nchw, params, *, in_c, out_c, hid_c, kernel, stride, se):
    """Bottleneck forward pass.  x_nchw: (N, in_c, H, W) float32."""
    assert stride in (1, 2) and kernel in (3, 5)
    N, C, H, W = x_nchw.shape
    assert C == in_c
    res = (stride == 1) and (in_c == out_c)
    pad = (kernel - 1) // 2
    H_out = (H + 2 * pad - kernel) // stride + 1
    W_out = (W + 2 * pad - kernel) // stride + 1

    x = jnp.transpose(x_nchw, (0, 2, 3, 1)).astype(jnp.float32)   # NHWC

    # Fold eval-mode BatchNorms into the conv weights / biases (host side).
    s1, b1 = _fold_bn(params["bn1_g"], params["bn1_b"], params["bn1_m"], params["bn1_v"])
    s2, b2 = _fold_bn(params["bn2_g"], params["bn2_b"], params["bn2_m"], params["bn2_v"])
    s3, b3 = _fold_bn(params["bn3_g"], params["bn3_b"], params["bn3_m"], params["bn3_v"])
    w1f = params["w1"] * s1[None, :]
    wdf = params["wd"] * s2[None, :]
    w3f = params["w3"] * s3[None, :]

    kern = functools.partial(
        _bottleneck_kernel, K=kernel, stride=stride, pad=pad,
        H=H, W=W, H_out=H_out, W_out=W_out, se=se, res=res)

    args = [x, w1f, b1.reshape(1, hid_c), wdf, b2.reshape(1, hid_c)]
    in_specs = [
        pl.BlockSpec((1, H, W, in_c), lambda n: (n, 0, 0, 0)),     # x (per batch)
        pl.BlockSpec((in_c, hid_c), lambda n: (0, 0)),             # w1 (resident)
        pl.BlockSpec((1, hid_c), lambda n: (0, 0)),                # b1
        pl.BlockSpec((kernel * kernel, hid_c), lambda n: (0, 0)),  # wd
        pl.BlockSpec((1, hid_c), lambda n: (0, 0)),                # b2
    ]
    if se:
        se_c = params["w_se1"].shape[1]
        # Fold the SE global-average-pool divisor into the fc1 weight.
        w_se1 = params["w_se1"] * (1.0 / float(H_out * W_out))
        args += [w_se1, params["w_se2"]]
        in_specs += [pl.BlockSpec((hid_c, se_c), lambda n: (0, 0)),
                     pl.BlockSpec((se_c, hid_c), lambda n: (0, 0))]
    args += [w3f, b3.reshape(1, out_c)]
    in_specs += [pl.BlockSpec((hid_c, out_c), lambda n: (0, 0)),
                 pl.BlockSpec((1, out_c), lambda n: (0, 0))]

    scratch = [pltpu.VMEM((H + 2 * pad, W + 2 * pad, hid_c), jnp.float32)]
    if stride > 1:
        scratch.append(pltpu.VMEM((H + 2 * pad - kernel + 1,
                                   W + 2 * pad - kernel + 1, hid_c), jnp.float32))

    y = pl.pallas_call(
        kern,
        grid=(N,),
        in_specs=in_specs,
        out_specs=pl.BlockSpec((1, H_out, W_out, out_c), lambda n: (n, 0, 0, 0)),
        out_shape=jax.ShapeDtypeStruct((N, H_out, W_out, out_c), jnp.float32),
        scratch_shapes=scratch,
        compiler_params=pltpu.CompilerParams(
            # batch axis shards across the 2 TensorCores on v7x; harmless on
            # single-TC v5e/v6e.
            dimension_semantics=("parallel",),
            # explicit scoped-VMEM budget, sized to also fit v7x (64 MiB phys).
            vmem_limit_bytes=48 * 1024 * 1024),
    )(*args)

    return jnp.transpose(y, (0, 3, 1, 2))                          # back to NCHW


# --------------------------- pure-JAX reference ----------------------------- #

def ref_forward(x_nchw, params, *, in_c, out_c, hid_c, kernel, stride, se):
    def bn(y, g, b, m, v):
        return g * (y - m) / jnp.sqrt(v + EPS) + b

    x = jnp.transpose(x_nchw, (0, 2, 3, 1)).astype(jnp.float32)
    N, H, W, _ = x.shape
    y = jnp.einsum("nhwc,cd->nhwd", x, params["w1"])
    y = jnp.maximum(bn(y, params["bn1_g"], params["bn1_b"],
                       params["bn1_m"], params["bn1_v"]), 0.0)

    pad = (kernel - 1) // 2
    H_out = (H + 2 * pad - kernel) // stride + 1
    W_out = (W + 2 * pad - kernel) // stride + 1
    yp = jnp.pad(y, ((0, 0), (pad, pad), (pad, pad), (0, 0)))
    acc = jnp.zeros((N, H_out, W_out, hid_c), jnp.float32)
    for kh in range(kernel):
        for kw in range(kernel):
            acc = acc + yp[:, kh:kh + H_out * stride:stride,
                           kw:kw + W_out * stride:stride, :] * params["wd"][kh * kernel + kw]
    y = bn(acc, params["bn2_g"], params["bn2_b"], params["bn2_m"], params["bn2_v"])

    if se:
        p = jnp.mean(y, axis=(1, 2))
        h = jnp.maximum(p @ params["w_se1"], 0.0)
        s = jnp.clip(h @ params["w_se2"] + 3.0, 0.0, 6.0) / 6.0
        y = y * s[:, None, None, :]
    y = jnp.maximum(y, 0.0)

    y = jnp.einsum("nhwc,cd->nhwd", y, params["w3"])
    y = bn(y, params["bn3_g"], params["bn3_b"], params["bn3_m"], params["bn3_v"])
    if stride == 1 and in_c == out_c:
        y = y + x
    return jnp.transpose(y, (0, 3, 1, 2))


# --------------------------------- main ------------------------------------ #

def make_params(key, in_c, out_c, hid_c, kernel, se):
    ks = jax.random.split(key, 5)

    def arange_f(n, a, b):
        return a + b * jnp.arange(n, dtype=jnp.float32)

    p = {
        "w1": 0.1 * jax.random.normal(ks[0], (in_c, hid_c), jnp.float32),
        "wd": 0.1 * jax.random.normal(ks[1], (kernel * kernel, hid_c), jnp.float32),
        "w3": 0.1 * jax.random.normal(ks[2], (hid_c, out_c), jnp.float32),
        "bn1_g": arange_f(hid_c, 1.0, 0.05), "bn1_b": arange_f(hid_c, 0.01, 0.02),
        "bn1_m": arange_f(hid_c, 0.00, 0.01), "bn1_v": arange_f(hid_c, 1.0, 0.03),
        "bn2_g": arange_f(hid_c, 0.9, 0.04), "bn2_b": arange_f(hid_c, -0.02, 0.01),
        "bn2_m": arange_f(hid_c, 0.01, 0.005), "bn2_v": arange_f(hid_c, 1.1, 0.02),
        "bn3_g": arange_f(out_c, 1.05, 0.03), "bn3_b": arange_f(out_c, 0.02, 0.015),
        "bn3_m": arange_f(out_c, -0.01, 0.01), "bn3_v": arange_f(out_c, 0.95, 0.025),
    }
    if se:
        p["w_se1"] = 0.1 * jax.random.normal(ks[3], (hid_c, hid_c // 4), jnp.float32)
        p["w_se2"] = 0.1 * jax.random.normal(ks[4], (hid_c // 4, hid_c), jnp.float32)
    return p


if __name__ == "__main__":
    key = jax.random.PRNGKey(0)
    kp1, kx1, kp2, kx2 = jax.random.split(key, 4)
    N, H, W = 2, 16, 16

    configs = [
        # residual + SE path (kernel=3, stride=1)
        dict(in_c=8, out_c=8, hid_c=16, kernel=3, stride=1, se=True),
        # no-SE, no-residual path (kernel=5, stride=1, out_c != in_c)
        dict(in_c=8, out_c=16, hid_c=24, kernel=5, stride=1, se=False),
    ]
    keys = [(kp1, kx1), (kp2, kx2)]

    for cfg, (kp, kx) in zip(configs, keys):
        params = make_params(kp, cfg["in_c"], cfg["out_c"], cfg["hid_c"],
                             cfg["kernel"], cfg["se"])
        x = jax.random.normal(kx, (N, cfg["in_c"], H, W), jnp.float32)

        out = jax.block_until_ready(bottleneck_forward(x, params, **cfg))
        ref = ref_forward(x, params, **cfg)

        pad = (cfg["kernel"] - 1) // 2
        H_out = (H + 2 * pad - cfg["kernel"]) // cfg["stride"] + 1
        W_out = (W + 2 * pad - cfg["kernel"]) // cfg["stride"] + 1
        assert out.shape == (N, cfg["out_c"], H_out, W_out), out.shape
        err = float(jnp.max(jnp.abs(out - ref)))
        assert jnp.allclose(out, ref, atol=1e-4, rtol=1e-4), err

    print("KERNEL_OK")
</pallas_src>

<mosaic_0001>
module attributes {stable_mosaic.version = 11 : i64} {
  func.func @_bottleneck_kernel(%arg0: i32, %arg1: memref<1x16x16x8xf32, #tpu.memory_space<vmem>>, %arg2: memref<8x16xf32, #tpu.memory_space<vmem>>, %arg3: memref<1x16xf32, #tpu.memory_space<vmem>>, %arg4: memref<9x16xf32, #tpu.memory_space<vmem>>, %arg5: memref<1x16xf32, #tpu.memory_space<vmem>>, %arg6: memref<16x4xf32, #tpu.memory_space<vmem>>, %arg7: memref<4x16xf32, #tpu.memory_space<vmem>>, %arg8: memref<16x8xf32, #tpu.memory_space<vmem>>, %arg9: memref<1x8xf32, #tpu.memory_space<vmem>>, %arg10: memref<1x16x16x8xf32, #tpu.memory_space<vmem>>, %arg11: memref<18x18x16xf32, #tpu.memory_space<vmem>>) attributes {dimension_semantics = [#tpu.dimension_semantics<parallel>], iteration_bounds = array<i64: 2>, scalar_prefetch = 0 : i64, scratch_operands = 1 : i64, tpu.core_type = #tpu.core_type<tc>, window_params = [{transform_indices = @transform_0, window_bounds = array<i64: 1, 16, 16, 8>}, {pipeline_mode = #tpu.pipeline_mode<synchronous>, transform_indices = @transform_1, window_bounds = array<i64: 8, 16>}, {pipeline_mode = #tpu.pipeline_mode<synchronous>, transform_indices = @transform_2, window_bounds = array<i64: 1, 16>}, {pipeline_mode = #tpu.pipeline_mode<synchronous>, transform_indices = @transform_3, window_bounds = array<i64: 9, 16>}, {pipeline_mode = #tpu.pipeline_mode<synchronous>, transform_indices = @transform_4, window_bounds = array<i64: 1, 16>}, {pipeline_mode = #tpu.pipeline_mode<synchronous>, transform_indices = @transform_5, window_bounds = array<i64: 16, 4>}, {pipeline_mode = #tpu.pipeline_mode<synchronous>, transform_indices = @transform_6, window_bounds = array<i64: 4, 16>}, {pipeline_mode = #tpu.pipeline_mode<synchronous>, transform_indices = @transform_7, window_bounds = array<i64: 16, 8>}, {pipeline_mode = #tpu.pipeline_mode<synchronous>, transform_indices = @transform_8, window_bounds = array<i64: 1, 8>}, {transform_indices = @transform_9, window_bounds = array<i64: 1, 16, 16, 8>}]} {
    %c0 = arith.constant 0 : index
    %c0_0 = arith.constant 0 : index
    %c0_1 = arith.constant 0 : index
    %c0_2 = arith.constant 0 : index
    %0 = vector.load %arg1[%c0, %c0_0, %c0_1, %c0_2] : memref<1x16x16x8xf32, #tpu.memory_space<vmem>>, vector<1x16x16x8xf32>
    %1 = vector.shape_cast %0 : vector<1x16x16x8xf32> to vector<256x8xf32>
    %c0_3 = arith.constant 0 : index
    %c0_4 = arith.constant 0 : index
    %2 = vector.load %arg2[%c0_3, %c0_4] : memref<8x16xf32, #tpu.memory_space<vmem>>, vector<8x16xf32>
    %cst = arith.constant dense<0.000000e+00> : vector<256x16xf32>
    %3 = tpu.matmul %1, %2, %cst {dimension_numbers = #tpu.dot_dimension_numbers<[1], [0], [0], [1], [0, 0, 1, 1], [], []>} : vector<256x8xf32>, vector<8x16xf32>, vector<256x16xf32> -> vector<256x16xf32>
    %c0_5 = arith.constant 0 : index
    %c0_6 = arith.constant 0 : index
    %4 = vector.load %arg3[%c0_5, %c0_6] : memref<1x16xf32, #tpu.memory_space<vmem>>, vector<1x16xf32>
    %5 = vector.broadcast %4 : vector<1x16xf32> to vector<256x16xf32>
    %6 = arith.addf %3, %5 : vector<256x16xf32>
    %cst_7 = arith.constant 0.000000e+00 : f32
    %7 = vector.broadcast %cst_7 : f32 to vector<256x16xf32>
    %8 = arith.maximumf %6, %7 : vector<256x16xf32>
    %cst_8 = arith.constant 0.000000e+00 : f32
    %9 = vector.broadcast %cst_8 : f32 to vector<1x18x16xf32>
    %cst_9 = arith.constant 0.000000e+00 : f32
    %10 = vector.broadcast %cst_9 : f32 to vector<16x1x16xf32>
    %c0_10 = arith.constant 0 : index
    %c0_11 = arith.constant 0 : index
    %c0_12 = arith.constant 0 : index
    %11 = vector.load %arg11[%c0_10, %c0_11, %c0_12] : memref<18x18x16xf32, #tpu.memory_space<vmem>>, vector<1x18x16xf32>
    tpu.vector_store %arg11[%c0_10, %c0_11, %c0_12], %9 {strides = array<i32>} : memref<18x18x16xf32, #tpu.memory_space<vmem>>, vector<1x18x16xf32>,
    %c17 = arith.constant 17 : index
    %c0_13 = arith.constant 0 : index
    %c0_14 = arith.constant 0 : index
    %12 = vector.load %arg11[%c17, %c0_13, %c0_14] : memref<18x18x16xf32, #tpu.memory_space<vmem>>, vector<1x18x16xf32>
    tpu.vector_store %arg11[%c17, %c0_13, %c0_14], %9 {strides = array<i32>} : memref<18x18x16xf32, #tpu.memory_space<vmem>>, vector<1x18x16xf32>,
    %c1 = arith.constant 1 : index
    %c0_15 = arith.constant 0 : index
    %c0_16 = arith.constant 0 : index
    %13 = vector.load %arg11[%c1, %c0_15, %c0_16] : memref<18x18x16xf32, #tpu.memory_space<vmem>>, vector<16x1x16xf32>
    tpu.vector_store %arg11[%c1, %c0_15, %c0_16], %10 {strides = array<i32>} : memref<18x18x16xf32, #tpu.memory_space<vmem>>, vector<16x1x16xf32>,
    %c1_17 = arith.constant 1 : index
    %c17_18 = arith.constant 17 : index
    %c0_19 = arith.constant 0 : index
    %14 = vector.load %arg11[%c1_17, %c17_18, %c0_19] : memref<18x18x16xf32, #tpu.memory_space<vmem>>, vector<16x1x16xf32>
    tpu.vector_store %arg11[%c1_17, %c17_18, %c0_19], %10 {strides = array<i32>} : memref<18x18x16xf32, #tpu.memory_space<vmem>>, vector<16x1x16xf32>,
    %15 = vector.shape_cast %8 : vector<256x16xf32> to vector<16x16x16xf32>
    %c1_20 = arith.constant 1 : index
    %c1_21 = arith.constant 1 : index
    %c0_22 = arith.constant 0 : index
    %16 = vector.load %arg11[%c1_20, %c1_21, %c0_22] : memref<18x18x16xf32, #tpu.memory_space<vmem>>, vector<16x16x16xf32>
    tpu.vector_store %arg11[%c1_20, %c1_21, %c0_22], %15 {strides = array<i32>} : memref<18x18x16xf32, #tpu.memory_space<vmem>>, vector<16x16x16xf32>,
    %c0_23 = arith.constant 0 : index
    %c0_24 = arith.constant 0 : index
    %17 = vector.load %arg4[%c0_23, %c0_24] : memref<9x16xf32, #tpu.memory_space<vmem>>, vector<9x16xf32>
    %cst_25 = arith.constant 0.000000e+00 : f32
    %18 = vector.broadcast %cst_25 : f32 to vector<16x16x16xf32>
    %c0_26 = arith.constant 0 : index
    %c0_27 = arith.constant 0 : index
    %c0_28 = arith.constant 0 : index
    %19 = vector.load %arg11[%c0_26, %c0_27, %c0_28] : memref<18x18x16xf32, #tpu.memory_space<vmem>>, vector<16x16x16xf32>
    %20 = vector.extract_strided_slice %17 {offsets = [0, 0], sizes = [1, 16], strides = [1, 1]} : vector<9x16xf32> to vector<1x16xf32>
    %21 = vector.shape_cast %20 : vector<1x16xf32> to vector<16xf32>
    %22 = vector.shape_cast %21 : vector<16xf32> to vector<1x1x16xf32>
    %23 = vector.broadcast %22 : vector<1x1x16xf32> to vector<16x16x16xf32>
    %24 = arith.mulf %19, %23 : vector<16x16x16xf32>
    %25 = arith.addf %18, %24 : vector<16x16x16xf32>
    %c0_29 = arith.constant 0 : index
    %c1_30 = arith.constant 1 : index
    %c0_31 = arith.constant 0 : index
    %26 = vector.load %arg11[%c0_29, %c1_30, %c0_31] : memref<18x18x16xf32, #tpu.memory_space<vmem>>, vector<16x16x16xf32>
    %27 = vector.extract_strided_slice %17 {offsets = [1, 0], sizes = [1, 16], strides = [1, 1]} : vector<9x16xf32> to vector<1x16xf32>
    %28 = vector.shape_cast %27 : vector<1x16xf32> to vector<16xf32>
    %29 = vector.shape_cast %28 : vector<16xf32> to vector<1x1x16xf32>
    %30 = vector.broadcast %29 : vector<1x1x16xf32> to vector<16x16x16xf32>
    %31 = arith.mulf %26, %30 : vector<16x16x16xf32>
    %32 = arith.addf %25, %31 : vector<16x16x16xf32>
    %c0_32 = arith.constant 0 : index
    %c2 = arith.constant 2 : index
    %c0_33 = arith.constant 0 : index
    %33 = vector.load %arg11[%c0_32, %c2, %c0_33] : memref<18x18x16xf32, #tpu.memory_space<vmem>>, vector<16x16x16xf32>
    %34 = vector.extract_strided_slice %17 {offsets = [2, 0], sizes = [1, 16], strides = [1, 1]} : vector<9x16xf32> to vector<1x16xf32>
    %35 = vector.shape_cast %34 : vector<1x16xf32> to vector<16xf32>
    %36 = vector.shape_cast %35 : vector<16xf32> to vector<1x1x16xf32>
    %37 = vector.broadcast %36 : vector<1x1x16xf32> to vector<16x16x16xf32>
    %38 = arith.mulf %33, %37 : vector<16x16x16xf32>
    %39 = arith.addf %32, %38 : vector<16x16x16xf32>
    %c1_34 = arith.constant 1 : index
    %c0_35 = arith.constant 0 : index
    %c0_36 = arith.constant 0 : index
    %40 = vector.load %arg11[%c1_34, %c0_35, %c0_36] : memref<18x18x16xf32, #tpu.memory_space<vmem>>, vector<16x16x16xf32>
    %41 = vector.extract_strided_slice %17 {offsets = [3, 0], sizes = [1, 16], strides = [1, 1]} : vector<9x16xf32> to vector<1x16xf32>
    %42 = vector.shape_cast %41 : vector<1x16xf32> to vector<16xf32>
    %43 = vector.shape_cast %42 : vector<16xf32> to vector<1x1x16xf32>
    %44 = vector.broadcast %43 : vector<1x1x16xf32> to vector<16x16x16xf32>
    %45 = arith.mulf %40, %44 : vector<16x16x16xf32>
    %46 = arith.addf %39, %45 : vector<16x16x16xf32>
    %c1_37 = arith.constant 1 : index
    %c1_38 = arith.constant 1 : index
    %c0_39 = arith.constant 0 : index
    %47 = vector.load %arg11[%c1_37, %c1_38, %c0_39] : memref<18x18x16xf32, #tpu.memory_space<vmem>>, vector<16x16x16xf32>
    %48 = vector.extract_strided_slice %17 {offsets = [4, 0], sizes = [1, 16], strides = [1, 1]} : vector<9x16xf32> to vector<1x16xf32>
    %49 = vector.shape_cast %48 : vector<1x16xf32> to vector<16xf32>
    %50 = vector.shape_cast %49 : vector<16xf32> to vector<1x1x16xf32>
    %51 = vector.broadcast %50 : vector<1x1x16xf32> to vector<16x16x16xf32>
    %52 = arith.mulf %47, %51 : vector<16x16x16xf32>
    %53 = arith.addf %46, %52 : vector<16x16x16xf32>
    %c1_40 = arith.constant 1 : index
    %c2_41 = arith.constant 2 : index
    %c0_42 = arith.constant 0 : index
    %54 = vector.load %arg11[%c1_40, %c2_41, %c0_42] : memref<18x18x16xf32, #tpu.memory_space<vmem>>, vector<16x16x16xf32>
    %55 = vector.extract_strided_slice %17 {offsets = [5, 0], sizes = [1, 16], strides = [1, 1]} : vector<9x16xf32> to vector<1x16xf32>
    %56 = vector.shape_cast %55 : vector<1x16xf32> to vector<16xf32>
    %57 = vector.shape_cast %56 : vector<16xf32> to vector<1x1x16xf32>
    %58 = vector.broadcast %57 : vector<1x1x16xf32> to vector<16x16x16xf32>
    %59 = arith.mulf %54, %58 : vector<16x16x16xf32>
    %60 = arith.addf %53, %59 : vector<16x16x16xf32>
    %c2_43 = arith.constant 2 : index
    %c0_44 = arith.constant 0 : index
    %c0_45 = arith.constant 0 : index
    %61 = vector.load %arg11[%c2_43, %c0_44, %c0_45] : memref<18x18x16xf32, #tpu.memory_space<vmem>>, vector<16x16x16xf32>
    %62 = vector.extract_strided_slice %17 {offsets = [6, 0], sizes = [1, 16], strides = [1, 1]} : vector<9x16xf32> to vector<1x16xf32>
    %63 = vector.shape_cast %62 : vector<1x16xf32> to vector<16xf32>
    %64 = vector.shape_cast %63 : vector<16xf32> to vector<1x1x16xf32>
    %65 = vector.broadcast %64 : vector<1x1x16xf32> to vector<16x16x16xf32>
    %66 = arith.mulf %61, %65 : vector<16x16x16xf32>
    %67 = arith.addf %60, %66 : vector<16x16x16xf32>
    %c2_46 = arith.constant 2 : index
    %c1_47 = arith.constant 1 : index
    %c0_48 = arith.constant 0 : index
    %68 = vector.load %arg11[%c2_46, %c1_47, %c0_48] : memref<18x18x16xf32, #tpu.memory_space<vmem>>, vector<16x16x16xf32>
    %69 = vector.extract_strided_slice %17 {offsets = [7, 0], sizes = [1, 16], strides = [1, 1]} : vector<9x16xf32> to vector<1x16xf32>
    %70 = vector.shape_cast %69 : vector<1x16xf32> to vector<16xf32>
    %71 = vector.shape_cast %70 : vector<16xf32> to vector<1x1x16xf32>
    %72 = vector.broadcast %71 : vector<1x1x16xf32> to vector<16x16x16xf32>
    %73 = arith.mulf %68, %72 : vector<16x16x16xf32>
    %74 = arith.addf %67, %73 : vector<16x16x16xf32>
    %c2_49 = arith.constant 2 : index
    %c2_50 = arith.constant 2 : index
    %c0_51 = arith.constant 0 : index
    %75 = vector.load %arg11[%c2_49, %c2_50, %c0_51] : memref<18x18x16xf32, #tpu.memory_space<vmem>>, vector<16x16x16xf32>
    %76 = vector.extract_strided_slice %17 {offsets = [8, 0], sizes = [1, 16], strides = [1, 1]} : vector<9x16xf32> to vector<1x16xf32>
    %77 = vector.shape_cast %76 : vector<1x16xf32> to vector<16xf32>
    %78 = vector.shape_cast %77 : vector<16xf32> to vector<1x1x16xf32>
    %79 = vector.broadcast %78 : vector<1x1x16xf32> to vector<16x16x16xf32>
    %80 = arith.mulf %75, %79 : vector<16x16x16xf32>
    %81 = arith.addf %74, %80 : vector<16x16x16xf32>
    %c0_52 = arith.constant 0 : index
    %c0_53 = arith.constant 0 : index
    %82 = vector.load %arg5[%c0_52, %c0_53] : memref<1x16xf32, #tpu.memory_space<vmem>>, vector<1x16xf32>
    %83 = vector.shape_cast %82 : vector<1x16xf32> to vector<1x1x16xf32>
    %84 = vector.broadcast %83 : vector<1x1x16xf32> to vector<16x16x16xf32>
    %85 = arith.addf %81, %84 : vector<16x16x16xf32>
    %86 = vector.shape_cast %85 : vector<16x16x16xf32> to vector<256x16xf32>
    %cst_54 = arith.constant dense<0.000000e+00> : vector<16xf32>
    %87 = vector.multi_reduction <add>, %86, %cst_54 [0] : vector<256x16xf32> to vector<16xf32>
    %88 = vector.shape_cast %87 : vector<16xf32> to vector<1x16xf32>
    %c0_55 = arith.constant 0 : index
    %c0_56 = arith.constant 0 : index
    %89 = vector.load %arg6[%c0_55, %c0_56] : memref<16x4xf32, #tpu.memory_space<vmem>>, vector<16x4xf32>
    %cst_57 = arith.constant dense<0.000000e+00> : vector<1x4xf32>
    %90 = tpu.matmul %88, %89, %cst_57 {dimension_numbers = #tpu.dot_dimension_numbers<[1], [0], [0], [1], [0, 0, 1, 1], [], []>} : vector<1x16xf32>, vector<16x4xf32>, vector<1x4xf32> -> vector<1x4xf32>
    %cst_58 = arith.constant 0.000000e+00 : f32
    %91 = vector.broadcast %cst_58 : f32 to vector<1x4xf32>
    %92 = arith.maximumf %90, %91 : vector<1x4xf32>
    %c0_59 = arith.constant 0 : index
    %c0_60 = arith.constant 0 : index
    %93 = vector.load %arg7[%c0_59, %c0_60] : memref<4x16xf32, #tpu.memory_space<vmem>>, vector<4x16xf32>
    %cst_61 = arith.constant dense<0.000000e+00> : vector<1x16xf32>
    %94 = tpu.matmul %92, %93, %cst_61 {dimension_numbers = #tpu.dot_dimension_numbers<[1], [0], [0], [1], [0, 0, 1, 1], [], []>} : vector<1x4xf32>, vector<4x16xf32>, vector<1x16xf32> -> vector<1x16xf32>
    %cst_62 = arith.constant 3.000000e+00 : f32
    %95 = vector.broadcast %cst_62 : f32 to vector<1x16xf32>
    %96 = arith.addf %94, %95 : vector<1x16xf32>
    %cst_63 = arith.constant 0.000000e+00 : f32
    %cst_64 = arith.constant 6.000000e+00 : f32
    %97 = vector.broadcast %cst_63 : f32 to vector<1x16xf32>
    %98 = arith.maximumf %97, %96 : vector<1x16xf32>
    %99 = vector.broadcast %cst_64 : f32 to vector<1x16xf32>
    %100 = arith.minimumf %99, %98 : vector<1x16xf32>
    %cst_65 = arith.constant 0.166666672 : f32
    %101 = vector.broadcast %cst_65 : f32 to vector<1x16xf32>
    %102 = arith.mulf %100, %101 : vector<1x16xf32>
    %103 = vector.shape_cast %102 : vector<1x16xf32> to vector<1x1x16xf32>
    %104 = vector.broadcast %103 : vector<1x1x16xf32> to vector<16x16x16xf32>
    %105 = arith.mulf %85, %104 : vector<16x16x16xf32>
    %cst_66 = arith.constant 0.000000e+00 : f32
    %106 = vector.broadcast %cst_66 : f32 to vector<16x16x16xf32>
    %107 = arith.maximumf %105, %106 : vector<16x16x16xf32>
    %108 = vector.shape_cast %107 : vector<16x16x16xf32> to vector<256x16xf32>
    %c0_67 = arith.constant 0 : index
    %c0_68 = arith.constant 0 : index
    %109 = vector.load %arg8[%c0_67, %c0_68] : memref<16x8xf32, #tpu.memory_space<vmem>>, vector<16x8xf32>
    %cst_69 = arith.constant dense<0.000000e+00> : vector<256x8xf32>
    %110 = tpu.matmul %108, %109, %cst_69 {dimension_numbers = #tpu.dot_dimension_numbers<[1], [0], [0], [1], [0, 0, 1, 1], [], []>} : vector<256x16xf32>, vector<16x8xf32>, vector<256x8xf32> -> vector<256x8xf32>
    %c0_70 = arith.constant 0 : index
    %c0_71 = arith.constant 0 : index
    %111 = vector.load %arg9[%c0_70, %c0_71] : memref<1x8xf32, #tpu.memory_space<vmem>>, vector<1x8xf32>
    %112 = vector.broadcast %111 : vector<1x8xf32> to vector<256x8xf32>
    %113 = arith.addf %110, %112 : vector<256x8xf32>
    %114 = arith.addf %113, %1 : vector<256x8xf32>
    %115 = vector.shape_cast %114 : vector<256x8xf32> to vector<1x16x16x8xf32>
    %c0_72 = arith.constant 0 : index
    %c0_73 = arith.constant 0 : index
    %c0_74 = arith.constant 0 : index
    %c0_75 = arith.constant 0 : index
    %116 = vector.load %arg10[%c0_72, %c0_73, %c0_74, %c0_75] : memref<1x16x16x8xf32, #tpu.memory_space<vmem>>, vector<1x16x16x8xf32>
    tpu.vector_store %arg10[%c0_72, %c0_73, %c0_74, %c0_75], %115 {strides = array<i32>} : memref<1x16x16x8xf32, #tpu.memory_space<vmem>>, vector<1x16x16x8xf32>,
    return
  }
  func.func @transform_0(%arg0: i32) -> (i32, i32, i32, i32) {
    %c0_i32 = arith.constant 0 : i32
    %c0_i32_0 = arith.constant 0 : i32
    %c0_i32_1 = arith.constant 0 : i32
    %c0_i32_2 = arith.constant 0 : i32
    return %arg0, %c0_i32, %c0_i32_0, %c0_i32_1 : i32, i32, i32, i32
  }
  func.func @transform_1(%arg0: i32) -> (i32, i32) {
    %c0_i32 = arith.constant 0 : i32
    %c0_i32_0 = arith.constant 0 : i32
    %c0_i32_1 = arith.constant 0 : i32
    return %c0_i32, %c0_i32_0 : i32, i32
  }
  func.func @transform_2(%arg0: i32) -> (i32, i32) {
    %c0_i32 = arith.constant 0 : i32
    %c0_i32_0 = arith.constant 0 : i32
    %c0_i32_1 = arith.constant 0 : i32
    return %c0_i32, %c0_i32_0 : i32, i32
  }
  func.func @transform_3(%arg0: i32) -> (i32, i32) {
    %c0_i32 = arith.constant 0 : i32
    %c0_i32_0 = arith.constant 0 : i32
    %c0_i32_1 = arith.constant 0 : i32
    return %c0_i32, %c0_i32_0 : i32, i32
  }
  func.func @transform_4(%arg0: i32) -> (i32, i32) {
    %c0_i32 = arith.constant 0 : i32
    %c0_i32_0 = arith.constant 0 : i32
    %c0_i32_1 = arith.constant 0 : i32
    return %c0_i32, %c0_i32_0 : i32, i32
  }
  func.func @transform_5(%arg0: i32) -> (i32, i32) {
    %c0_i32 = arith.constant 0 : i32
    %c0_i32_0 = arith.constant 0 : i32
    %c0_i32_1 = arith.constant 0 : i32
    return %c0_i32, %c0_i32_0 : i32, i32
  }
  func.func @transform_6(%arg0: i32) -> (i32, i32) {
    %c0_i32 = arith.constant 0 : i32
    %c0_i32_0 = arith.constant 0 : i32
    %c0_i32_1 = arith.constant 0 : i32
    return %c0_i32, %c0_i32_0 : i32, i32
  }
  func.func @transform_7(%arg0: i32) -> (i32, i32) {
    %c0_i32 = arith.constant 0 : i32
    %c0_i32_0 = arith.constant 0 : i32
    %c0_i32_1 = arith.constant 0 : i32
    return %c0_i32, %c0_i32_0 : i32, i32
  }
  func.func @transform_8(%arg0: i32) -> (i32, i32) {
    %c0_i32 = arith.constant 0 : i32
    %c0_i32_0 = arith.constant 0 : i32
    %c0_i32_1 = arith.constant 0 : i32
    return %c0_i32, %c0_i32_0 : i32, i32
  }
  func.func @transform_9(%arg0: i32) -> (i32, i32, i32, i32) {
    %c0_i32 = arith.constant 0 : i32
    %c0_i32_0 = arith.constant 0 : i32
    %c0_i32_1 = arith.constant 0 : i32
    %c0_i32_2 = arith.constant 0 : i32
    return %arg0, %c0_i32, %c0_i32_0, %c0_i32_1 : i32, i32, i32, i32
  }
}

</mosaic_0001>

<llo_original>
// kernel: tpu_custom_call.1
$region0: #{tpu_custom_call.1}
  #allocation0 [shape = 'u32[]', space=smem, size = 0x4, offset = 0x4, fixed_abs, tag = 'smem constant byte address 0x4 - core index']
  #allocation1 [shape = 'u32[72,128]{1,0:T(1,128)}', space=vmem, size = 0x9000, scoped, tag = 'internal scratch']
  #allocation2 [shape = 'f32[18,18,16]{2,1,0:T(8,128)}', space=vmem, size = 0x36000, scoped, tag = 'scratch operand']
  %s0 = inlined_call_operand.vmem [shape: f32[2,16,16,8], index: 0, kind: input, shape index: {}]
  %s1 = inlined_call_operand.vmem [shape: f32[8,16], index: 1, kind: input, shape index: {}]
  %s2 = inlined_call_operand.vmem [shape: f32[1,16], index: 2, kind: input, shape index: {}]
  %s3 = inlined_call_operand.vmem [shape: f32[9,16], index: 3, kind: input, shape index: {}]
  %s4 = inlined_call_operand.vmem [shape: f32[1,16], index: 4, kind: input, shape index: {}]
  %s5 = inlined_call_operand.vmem [shape: f32[16,4], index: 5, kind: input, shape index: {}]
  %s6 = inlined_call_operand.vmem [shape: f32[4,16], index: 6, kind: input, shape index: {}]
  %s7 = inlined_call_operand.vmem [shape: f32[16,8], index: 7, kind: input, shape index: {}]
  %s8 = inlined_call_operand.vmem [shape: f32[1,8], index: 8, kind: input, shape index: {}]
  %s9 = inlined_call_operand.vmem [shape: f32[2,16,16,8], index: 9, kind: output, shape index: {}]
  %s10 = sld [smem:[#allocation0]]
  $region69: #{tpu_custom_call.1} parent=0
    _
  %s12 = ssub.s32 1, %s10
  %s13 = scalar_select 0, %s12, %s10
  loop: start=0, step=1, limit=4
  $region2: #{tpu_custom_call.1} parent=0 // loop_pre_header
    _
  $region3: #{tpu_custom_call.1} parent=0 // loop_header
    %s15 = sphi 0, %s19
    %p16 = scmp.ge.s32.totalorder %s15, 4
    %s25 = sphi 0, %s27
    %s28 = sphi 0, %s25
    %s29 = sphi 0, %s28
    %s45 = sphi 0, %s29
    %s49 = sphi 0, %s49
    %s51 = sphi 0, %s49
    %s52 = sphi 0, %s51
    %s66 = sphi 0, %s52
    %s70 = sphi 0, %s70
    %s72 = sphi 0, %s70
    %s73 = sphi 0, %s72
    %s87 = sphi 0, %s73
    %s91 = sphi 0, %s91
    %s93 = sphi 0, %s91
    %s94 = sphi 0, %s93
    %s108 = sphi 0, %s94
    %s112 = sphi 0, %s112
    %s114 = sphi 0, %s112
    %s115 = sphi 0, %s114
    %s129 = sphi 0, %s115
    %s133 = sphi 0, %s133
    %s135 = sphi 0, %s133
    %s136 = sphi 0, %s135
    %s150 = sphi 0, %s136
    %s154 = sphi 0, %s154
    %s156 = sphi 0, %s154
    %s157 = sphi 0, %s156
    %s171 = sphi 0, %s157
    %s175 = sphi 0, %s175
    %s177 = sphi 0, %s175
    %s178 = sphi 0, %s177
    %s192 = sphi 0, %s178
    %s196 = sphi 0, %s196
    %s198 = sphi 0, %s196
    %s199 = sphi 0, %s198
    %s213 = sphi 0, %s199
    %s219 = sphi 0, %s221
    %s222 = sphi 0, %s219
    %s223 = sphi 0, %s222
    %s239 = sphi 0, %s223
  $region4: #{tpu_custom_call.1} parent=0 // loop_header_branch
    %18 = sbr.rel (%p16) target = $region8
  $region5: #{tpu_custom_call.1} parent=0 // loop_body
    %s20 = ssub.s32 %s15, 1
    %s21 = ssub.s32 %s15, 2
    %s22 = sadd.s32 %s15, 1
    %s23 = ssub.s32 %s15, %s22
    %p24 = scmp.eq.s32.totalorder %s23, 0
    %s26 = sadd.s32 %s25, 1
    %s27 = scalar_select %p24, %s25, %s26
    %p30 = pneg %p24
    %p31 = scmp.eq.s32.totalorder %s15, 1
    %p32 = por %p30, %p31
    %p33 = scmp.ne.s32.totalorder %s25, %s28
    %p34 = scmp.eq.s32.totalorder %s15, 0
    %p35 = por %p33, %p34
    %p36 = scmp.ne.s32.totalorder %s25, %s28
    %p37 = scmp.eq.s32.totalorder %s20, 1
    %p38 = por %p36, %p37
    %p39 = scmp.ne.s32.totalorder %s28, %s29
    %p40 = scmp.eq.s32.totalorder %s20, 0
    %p41 = por %p39, %p40
    %p42 = scmp.ne.s32.totalorder %s28, %s29
    %p43 = scmp.eq.s32.totalorder %s21, 1
    %p44 = por %p42, %p43
    %p46 = scmp.ne.s32.totalorder %s29, %s45
    %p47 = scmp.eq.s32.totalorder %s21, 0
    %p48 = por %p46, %p47
    %s50 = sadd.s32 %s49, 1
    %p53 = scmp.eq.s32.totalorder %s15, 1
    %p54 = scmp.ne.s32.totalorder %s49, %s51
    %p55 = scmp.eq.s32.totalorder %s15, 0
    %p56 = por %p54, %p55
    %p57 = scmp.ne.s32.totalorder %s49, %s51
    %p58 = scmp.eq.s32.totalorder %s20, 1
    %p59 = por %p57, %p58
    %p60 = scmp.ne.s32.totalorder %s51, %s52
    %p61 = scmp.eq.s32.totalorder %s20, 0
    %p62 = por %p60, %p61
    %p63 = scmp.ne.s32.totalorder %s51, %s52
    %p64 = scmp.eq.s32.totalorder %s21, 1
    %p65 = por %p63, %p64
    %p67 = scmp.ne.s32.totalorder %s52, %s66
    %p68 = scmp.eq.s32.totalorder %s21, 0
    %p69 = por %p67, %p68
    %s71 = sadd.s32 %s70, 1
    %p74 = scmp.eq.s32.totalorder %s15, 1
    %p75 = scmp.ne.s32.totalorder %s70, %s72
    %p76 = scmp.eq.s32.totalorder %s15, 0
    %p77 = por %p75, %p76
    %p78 = scmp.ne.s32.totalorder %s70, %s72
    %p79 = scmp.eq.s32.totalorder %s20, 1
    %p80 = por %p78, %p79
    %p81 = scmp.ne.s32.totalorder %s72, %s73
    %p82 = scmp.eq.s32.totalorder %s20, 0
    %p83 = por %p81, %p82
    %p84 = scmp.ne.s32.totalorder %s72, %s73
    %p85 = scmp.eq.s32.totalorder %s21, 1
    %p86 = por %p84, %p85
    %p88 = scmp.ne.s32.totalorder %s73, %s87
    %p89 = scmp.eq.s32.totalorder %s21, 0
    %p90 = por %p88, %p89
    %s92 = sadd.s32 %s91, 1
    %p95 = scmp.eq.s32.totalorder %s15, 1
    %p96 = scmp.ne.s32.totalorder %s91, %s93
    %p97 = scmp.eq.s32.totalorder %s15, 0
    %p98 = por %p96, %p97
    %p99 = scmp.ne.s32.totalorder %s91, %s93
    %p100 = scmp.eq.s32.totalorder %s20, 1
    %p101 = por %p99, %p100
    %p102 = scmp.ne.s32.totalorder %s93, %s94
    %p103 = scmp.eq.s32.totalorder %s20, 0
    %p104 = por %p102, %p103
    %p105 = scmp.ne.s32.totalorder %s93, %s94
    %p106 = scmp.eq.s32.totalorder %s21, 1
    %p107 = por %p105, %p106
    %p109 = scmp.ne.s32.totalorder %s94, %s108
    %p110 = scmp.eq.s32.totalorder %s21, 0
    %p111 = por %p109, %p110
    %s113 = sadd.s32 %s112, 1
    %p116 = scmp.eq.s32.totalorder %s15, 1
    %p117 = scmp.ne.s32.totalorder %s112, %s114
    %p118 = scmp.eq.s32.totalorder %s15, 0
    %p119 = por %p117, %p118
    %p120 = scmp.ne.s32.totalorder %s112, %s114
    %p121 = scmp.eq.s32.totalorder %s20, 1
    %p122 = por %p120, %p121
    %p123 = scmp.ne.s32.totalorder %s114, %s115
    %p124 = scmp.eq.s32.totalorder %s20, 0
    %p125 = por %p123, %p124
    %p126 = scmp.ne.s32.totalorder %s114, %s115
    %p127 = scmp.eq.s32.totalorder %s21, 1
    %p128 = por %p126, %p127
    %p130 = scmp.ne.s32.totalorder %s115, %s129
    %p131 = scmp.eq.s32.totalorder %s21, 0
    %p132 = por %p130, %p131
    %s134 = sadd.s32 %s133, 1
    %p137 = scmp.eq.s32.totalorder %s15, 1
    %p138 = scmp.ne.s32.totalorder %s133, %s135
    %p139 = scmp.eq.s32.totalorder %s15, 0
    %p140 = por %p138, %p139
    %p141 = scmp.ne.s32.totalorder %s133, %s135
    %p142 = scmp.eq.s32.totalorder %s20, 1
    %p143 = por %p141, %p142
    %p144 = scmp.ne.s32.totalorder %s135, %s136
    %p145 = scmp.eq.s32.totalorder %s20, 0
    %p146 = por %p144, %p145
    %p147 = scmp.ne.s32.totalorder %s135, %s136
    %p148 = scmp.eq.s32.totalorder %s21, 1
    %p149 = por %p147, %p148
    %p151 = scmp.ne.s32.totalorder %s136, %s150
    %p152 = scmp.eq.s32.totalorder %s21, 0
    %p153 = por %p151, %p152
    %s155 = sadd.s32 %s154, 1
    %p158 = scmp.eq.s32.totalorder %s15, 1
    %p159 = scmp.ne.s32.totalorder %s154, %s156
    %p160 = scmp.eq.s32.totalorder %s15, 0
    %p161 = por %p159, %p160
    %p162 = scmp.ne.s32.totalorder %s154, %s156
    %p163 = scmp.eq.s32.totalorder %s20, 1
    %p164 = por %p162, %p163
    %p165 = scmp.ne.s32.totalorder %s156, %s157
    %p166 = scmp.eq.s32.totalorder %s20, 0
    %p167 = por %p165, %p166
    %p168 = scmp.ne.s32.totalorder %s156, %s157
    %p169 = scmp.eq.s32.totalorder %s21, 1
    %p170 = por %p168, %p169
    %p172 = scmp.ne.s32.totalorder %s157, %s171
    %p173 = scmp.eq.s32.totalorder %s21, 0
    %p174 = por %p172, %p173
    %s176 = sadd.s32 %s175, 1
    %p179 = scmp.eq.s32.totalorder %s15, 1
    %p180 = scmp.ne.s32.totalorder %s175, %s177
    %p181 = scmp.eq.s32.totalorder %s15, 0
    %p182 = por %p180, %p181
    %p183 = scmp.ne.s32.totalorder %s175, %s177
    %p184 = scmp.eq.s32.totalorder %s20, 1
    %p185 = por %p183, %p184
    %p186 = scmp.ne.s32.totalorder %s177, %s178
    %p187 = scmp.eq.s32.totalorder %s20, 0
    %p188 = por %p186, %p187
    %p189 = scmp.ne.s32.totalorder %s177, %s178
    %p190 = scmp.eq.s32.totalorder %s21, 1
    %p191 = por %p189, %p190
    %p193 = scmp.ne.s32.totalorder %s178, %s192
    %p194 = scmp.eq.s32.totalorder %s21, 0
    %p195 = por %p193, %p194
    %s197 = sadd.s32 %s196, 1
    %p200 = scmp.eq.s32.totalorder %s15, 1
    %p201 = scmp.ne.s32.totalorder %s196, %s198
    %p202 = scmp.eq.s32.totalorder %s15, 0
    %p203 = por %p201, %p202
    %p204 = scmp.ne.s32.totalorder %s196, %s198
    %p205 = scmp.eq.s32.totalorder %s20, 1
    %p206 = por %p204, %p205
    %p207 = scmp.ne.s32.totalorder %s198, %s199
    %p208 = scmp.eq.s32.totalorder %s20, 0
    %p209 = por %p207, %p208
    %p210 = scmp.ne.s32.totalorder %s198, %s199
    %p211 = scmp.eq.s32.totalorder %s21, 1
    %p212 = por %p210, %p211
    %p214 = scmp.ne.s32.totalorder %s199, %s213
    %p215 = scmp.eq.s32.totalorder %s21, 0
    %p216 = por %p214, %p215
    %s217 = ssub.s32 %s15, %s22
    %p218 = scmp.eq.s32.totalorder %s217, 0
    %s220 = sadd.s32 %s219, 1
    %s221 = scalar_select %p218, %s219, %s220
    %p224 = pneg %p218
    %p225 = scmp.eq.s32.totalorder %s15, 1
    %p226 = por %p224, %p225
    %p227 = scmp.ne.s32.totalorder %s219, %s222
    %p228 = scmp.eq.s32.totalorder %s15, 0
    %p229 = por %p227, %p228
    %p230 = scmp.ne.s32.totalorder %s219, %s222
    %p231 = scmp.eq.s32.totalorder %s20, 1
    %p232 = por %p230, %p231
    %p233 = scmp.ne.s32.totalorder %s222, %s223
    %p234 = scmp.eq.s32.totalorder %s20, 0
    %p235 = por %p233, %p234
    %p236 = scmp.ne.s32.totalorder %s222, %s223
    %p237 = scmp.eq.s32.totalorder %s21, 1
    %p238 = por %p236, %p237
    %p240 = scmp.ne.s32.totalorder %s223, %s239
    %p241 = scmp.eq.s32.totalorder %s21, 0
    %p242 = por %p240, %p241
    %p243 = scmp.le.s32.totalorder 1, %s15
    %p244 = scmp.lt.s32.totalorder %s15, 3
    %p245 = pnand %p243, %p244
    %p246 = pneg %p245
    // Predicated region
    $region9: #{tpu_custom_call.1} parent=5 // pred_check
      _
    $region10: #{tpu_custom_call.1} parent=5 // pred_check_branch
      %248 = sbr.rel (%p245) target = $region12
    $region11: #{tpu_custom_call.1} parent=5 // pred_region
      %s249 = ssub.s32 %s15, 1
      // Predicated region
      $region13: #{tpu_custom_call.1} parent=11 // pred_check
        %p250 = pneg %p62
      $region14: #{tpu_custom_call.1} parent=11 // pred_check_branch
        %252 = sbr.rel (%p250) target = $region16
      $region15: #{tpu_custom_call.1} parent=11 // pred_region
        _
      $region16: #{tpu_custom_call.1} parent=11 // pred_fallthru
        _
      // Predicated region
      $region17: #{tpu_custom_call.1} parent=11 // pred_check
        %p253 = pneg %p83
      $region18: #{tpu_custom_call.1} parent=11 // pred_check_branch
        %255 = sbr.rel (%p253) target = $region20
      $region19: #{tpu_custom_call.1} parent=11 // pred_region
        _
      $region20: #{tpu_custom_call.1} parent=11 // pred_fallthru
        _
      // Predicated region
      $region21: #{tpu_custom_call.1} parent=11 // pred_check
        %p256 = pneg %p104
      $region22: #{tpu_custom_call.1} parent=11 // pred_check_branch
        %258 = sbr.rel (%p256) target = $region24
      $region23: #{tpu_custom_call.1} parent=11 // pred_region
        _
      $region24: #{tpu_custom_call.1} parent=11 // pred_fallthru
        _
      // Predicated region
      $region25: #{tpu_custom_call.1} parent=11 // pred_check
        %p259 = pneg %p125
      $region26: #{tpu_custom_call.1} parent=11 // pred_check_branch
        %261 = sbr.rel (%p259) target = $region28
      $region27: #{tpu_custom_call.1} parent=11 // pred_region
        _
      $region28: #{tpu_custom_call.1} parent=11 // pred_fallthru
        _
      // Predicated region
      $region29: #{tpu_custom_call.1} parent=11 // pred_check
        %p262 = pneg %p146
      $region30: #{tpu_custom_call.1} parent=11 // pred_check_branch
        %264 = sbr.rel (%p262) target = $region32
      $region31: #{tpu_custom_call.1} parent=11 // pred_region
        _
      $region32: #{tpu_custom_call.1} parent=11 // pred_fallthru
        _
      // Predicated region
      $region33: #{tpu_custom_call.1} parent=11 // pred_check
        %p265 = pneg %p167
      $region34: #{tpu_custom_call.1} parent=11 // pred_check_branch
        %267 = sbr.rel (%p265) target = $region36
      $region35: #{tpu_custom_call.1} parent=11 // pred_region
        _
      $region36: #{tpu_custom_call.1} parent=11 // pred_fallthru
        _
      // Predicated region
      $region37: #{tpu_custom_call.1} parent=11 // pred_check
        %p268 = pneg %p188
      $region38: #{tpu_custom_call.1} parent=11 // pred_check_branch
        %270 = sbr.rel (%p268) target = $region40
      $region39: #{tpu_custom_call.1} parent=11 // pred_region
        _
      $region40: #{tpu_custom_call.1} parent=11 // pred_fallthru
        _
      // Predicated region
      $region41: #{tpu_custom_call.1} parent=11 // pred_check
        %p271 = pneg %p209
      $region42: #{tpu_custom_call.1} parent=11 // pred_check_branch
        %273 = sbr.rel (%p271) target = $region44
      $region43: #{tpu_custom_call.1} parent=11 // pred_region
        _
      $region44: #{tpu_custom_call.1} parent=11 // pred_fallthru
        _
    $region12: #{tpu_custom_call.1} parent=5 // pred_fallthru
      _
    %p274 = scmp.lt.s32.totalorder %s15, 2
    // Predicated region
    $region45: #{tpu_custom_call.1} parent=5 // pred_check
      %p275 = pneg %p274
    $region46: #{tpu_custom_call.1} parent=5 // pred_check_branch
      %277 = sbr.rel (%p275) target = $region48
    $region47: #{tpu_custom_call.1} parent=5 // pred_region
      // Predicated region
      $region49: #{tpu_custom_call.1} parent=47 // pred_check
        %p278 = pneg %p35
      $region50: #{tpu_custom_call.1} parent=47 // pred_check_branch
        %280 = sbr.rel (%p278) target = $region52
      $region51: #{tpu_custom_call.1} parent=47 // pred_region
        %p281 = scmp.lt.s32.totalorder %s15, 1
        %s282 = scalar_select %p281, %s15, 1
        %s283 = smul.addr %s282, 32
        %s284 = smul.addr %s283, 8
        %s285 = scalar_lea.vmem %s0, %s284
      $region52: #{tpu_custom_call.1} parent=47 // pred_fallthru
        _
    $region48: #{tpu_custom_call.1} parent=5 // pred_fallthru
      _
    %p286 = scmp.le.s32.totalorder 1, %s15
    %p287 = scmp.lt.s32.totalorder %s15, 3
    %p288 = pnand %p286, %p287
    %p289 = pneg %p288
    // Predicated region
    $region53: #{tpu_custom_call.1} parent=5 // pred_check
      _
    $region54: #{tpu_custom_call.1} parent=5 // pred_check_branch
      %291 = sbr.rel (%p288) target = $region56
    $region55: #{tpu_custom_call.1} parent=5 // pred_region
      %s292 = ssub.s32 %s15, 1
      %p293 = scmp.lt.s32.totalorder %s20, 1
      %s294 = scalar_select %p293, %s20, 1
      %s295 = smul.addr %s294, 32
      %s296 = smul.addr %s295, 8
      %s297 = scalar_lea.vmem %s0, %s296
      %p298 = pneg %p41
      %p299 = pneg %p38
      %p300 = pneg %p62
      %p301 = pneg %p59
      %p302 = pneg %p83
      %p303 = pneg %p80
      %p304 = pneg %p104
      %p305 = pneg %p101
      %p306 = pneg %p125
      %p307 = pneg %p122
      %p308 = pneg %p146
      %p309 = pneg %p143
      %p310 = pneg %p167
      %p311 = pneg %p164
      %p312 = pneg %p188
      %p313 = pneg %p185
      %p314 = pneg %p209
      %p315 = pneg %p206
      %p316 = pneg %p235
      %p317 = pneg %p232
      %p318 = scmp.lt.s32.totalorder %s20, 1
      %s319 = scalar_select %p318, %s20, 1
      %s320 = smul.addr %s319, 32
      %s321 = smul.addr %s320, 8
      %s322 = scalar_lea.vmem %s9, %s321
      %p323 = scmp.lt.s32.totalorder %s20, 1
      %s324 = scalar_select %p323, %s20, 1
      %s325 = smul.addr %s324, 32
      %s326 = smul.addr %s325, 8
      %s327 = scalar_lea.vmem %s0, %s326
      %p328 = scmp.lt.s32.totalorder %s20, 1
      %s329 = scalar_select %p328, %s20, 1
      %s330 = smul.addr %s329, 32
      %s331 = smul.addr %s330, 8
      %s332 = scalar_lea.vmem %s9, %s331
      %v333 = vld [vmem:[%s327] sm:$0xff]
      %v334 = vld [vmem:[%s327 + $0x8] sm:$0xff]
      %v335 = vld [vmem:[%s327 + $0x10] sm:$0xff]
      %v336 = vld [vmem:[%s327 + $0x18] sm:$0xff]
      %v337 = vld [vmem:[%s327 + $0x20] sm:$0xff]
      %v338 = vld [vmem:[%s327 + $0x28] sm:$0xff]
      %v339 = vld [vmem:[%s327 + $0x30] sm:$0xff]
      %v340 = vld [vmem:[%s327 + $0x38] sm:$0xff]
      %v341 = vld [vmem:[%s327 + $0x40] sm:$0xff]
      %v342 = vld [vmem:[%s327 + $0x48] sm:$0xff]
      %v343 = vld [vmem:[%s327 + $0x50] sm:$0xff]
      %v344 = vld [vmem:[%s327 + $0x58] sm:$0xff]
      %v345 = vld [vmem:[%s327 + $0x60] sm:$0xff]
      %v346 = vld [vmem:[%s327 + $0x68] sm:$0xff]
      %v347 = vld [vmem:[%s327 + $0x70] sm:$0xff]
      %v348 = vld [vmem:[%s327 + $0x78] sm:$0xff]
      %v349 = vld [vmem:[%s327 + $0x80] sm:$0xff]
      %v350 = vld [vmem:[%s327 + $0x88] sm:$0xff]
      %v351 = vld [vmem:[%s327 + $0x90] sm:$0xff]
      %v352 = vld [vmem:[%s327 + $0x98] sm:$0xff]
      %v353 = vld [vmem:[%s327 + $0xa0] sm:$0xff]
      %v354 = vld [vmem:[%s327 + $0xa8] sm:$0xff]
      %v355 = vld [vmem:[%s327 + $0xb0] sm:$0xff]
      %v356 = vld [vmem:[%s327 + $0xb8] sm:$0xff]
      %v357 = vld [vmem:[%s327 + $0xc0] sm:$0xff]
      %v358 = vld [vmem:[%s327 + $0xc8] sm:$0xff]
      %v359 = vld [vmem:[%s327 + $0xd0] sm:$0xff]
      %v360 = vld [vmem:[%s327 + $0xd8] sm:$0xff]
      %v361 = vld [vmem:[%s327 + $0xe0] sm:$0xff]
      %v362 = vld [vmem:[%s327 + $0xe8] sm:$0xff]
      %v363 = vld [vmem:[%s327 + $0xf0] sm:$0xff]
      %v364 = vld [vmem:[%s327 + $0xf8] sm:$0xff]
      %v365 = vld [vmem:[%s1] sm:$0xff]
      %v366 = vld [vmem:[%s2] sm:$0x1]
      %v368 = vperm.slane %v366, 0
      %vm370 = vcmask 64512
      %v372 = vsel %vm370, %v333, 0
      %v375 = vsel %vm370, %v334, 0
      %v378 = vsel %vm370, %v335, 0
      %v381 = vsel %vm370, %v336, 0
      %v384 = vsel %vm370, %v337, 0
      %v387 = vsel %vm370, %v338, 0
      %v390 = vsel %vm370, %v339, 0
      %v393 = vsel %vm370, %v340, 0
      %v396 = vsel %vm370, %v341, 0
      %v399 = vsel %vm370, %v342, 0
      %v402 = vsel %vm370, %v343, 0
      %v405 = vsel %vm370, %v344, 0
      %v408 = vsel %vm370, %v345, 0
      %v411 = vsel %vm370, %v346, 0
      %v414 = vsel %vm370, %v347, 0
      %v417 = vsel %vm370, %v348, 0
      %v420 = vsel %vm370, %v349, 0
      %v423 = vsel %vm370, %v350, 0
      %v426 = vsel %vm370, %v351, 0
      %v429 = vsel %vm370, %v352, 0
      %v432 = vsel %vm370, %v353, 0
      %v435 = vsel %vm370, %v354, 0
      %v438 = vsel %vm370, %v355, 0
      %v441 = vsel %vm370, %v356, 0
      %v444 = vsel %vm370, %v357, 0
      %v447 = vsel %vm370, %v358, 0
      %v450 = vsel %vm370, %v359, 0
      %v453 = vsel %vm370, %v360, 0
      %v456 = vsel %vm370, %v361, 0
      %v459 = vsel %vm370, %v362, 0
      %v462 = vsel %vm370, %v363, 0
      %v465 = vsel %vm370, %v364, 0
      %467 = vmatpush.msra.mxu0 0.0
      %468 = vmatpush.msra.mxu0 0.0
      %469 = vmatpush.msra.mxu0 0.0
      %470 = vmatpush.msra.mxu0 0.0
      %471 = vmatpush.msra.mxu0 0.0
      %472 = vmatpush.msra.mxu0 0.0
      %473 = vmatpush.msra.mxu0 0.0
      %474 = vmatpush.msra.mxu0 0.0
      %475 = vmatpush.msra.mxu0 0.0
      %476 = vmatpush.msra.mxu0 0.0
      %477 = vmatpush.msra.mxu0 0.0
      %478 = vmatpush.msra.mxu0 0.0
      %479 = vmatpush.msra.mxu0 0.0
      %480 = vmatpush.msra.mxu0 0.0
      %481 = vmatpush.msra.mxu0 0.0
      %482 = vmatpush.msra.mxu0 %v365
      %483 = vmatmul.f32.gmra.mxu0 %v372
      %v484 = vpop.f32.mrf.mxu0
      %v485 = vadd.f32 %v368, %v484
      %486 = vmatmul.f32.gmra.mxu0 %v375
      %v487 = vpop.f32.mrf.mxu0
      %v488 = vadd.f32 %v368, %v487
      %489 = vmatmul.f32.gmra.mxu0 %v378
      %v490 = vpop.f32.mrf.mxu0
      %v491 = vadd.f32 %v368, %v490
      %492 = vmatmul.f32.gmra.mxu0 %v381
      %v493 = vpop.f32.mrf.mxu0
      %v494 = vadd.f32 %v368, %v493
      %495 = vmatmul.f32.gmra.mxu0 %v384
      %v496 = vpop.f32.mrf.mxu0
      %v497 = vadd.f32 %v368, %v496
      %498 = vmatmul.f32.gmra.mxu0 %v387
      %v499 = vpop.f32.mrf.mxu0
      %v500 = vadd.f32 %v368, %v499
      %501 = vmatmul.f32.gmra.mxu0 %v390
      %v502 = vpop.f32.mrf.mxu0
      %v503 = vadd.f32 %v368, %v502
      %504 = vmatmul.f32.gmra.mxu0 %v393
      %v505 = vpop.f32.mrf.mxu0
      %v506 = vadd.f32 %v368, %v505
      %507 = vmatmul.f32.gmra.mxu0 %v396
      %v508 = vpop.f32.mrf.mxu0
      %v509 = vadd.f32 %v368, %v508
      %510 = vmatmul.f32.gmra.mxu0 %v399
      %v511 = vpop.f32.mrf.mxu0
      %v512 = vadd.f32 %v368, %v511
      %513 = vmatmul.f32.gmra.mxu0 %v402
      %v514 = vpop.f32.mrf.mxu0
      %v515 = vadd.f32 %v368, %v514
      %516 = vmatmul.f32.gmra.mxu0 %v405
      %v517 = vpop.f32.mrf.mxu0
      %v518 = vadd.f32 %v368, %v517
      %519 = vmatmul.f32.gmra.mxu0 %v408
      %v520 = vpop.f32.mrf.mxu0
      %v521 = vadd.f32 %v368, %v520
      %522 = vmatmul.f32.gmra.mxu0 %v411
      %v523 = vpop.f32.mrf.mxu0
      %v524 = vadd.f32 %v368, %v523
      %525 = vmatmul.f32.gmra.mxu0 %v414
      %v526 = vpop.f32.mrf.mxu0
      %v527 = vadd.f32 %v368, %v526
      %528 = vmatmul.f32.gmra.mxu0 %v417
      %v529 = vpop.f32.mrf.mxu0
      %v530 = vadd.f32 %v368, %v529
      %531 = vmatmul.f32.gmra.mxu0 %v420
      %v532 = vpop.f32.mrf.mxu0
      %v533 = vadd.f32 %v368, %v532
      %534 = vmatmul.f32.gmra.mxu0 %v423
      %v535 = vpop.f32.mrf.mxu0
      %v536 = vadd.f32 %v368, %v535
      %537 = vmatmul.f32.gmra.mxu0 %v426
      %v538 = vpop.f32.mrf.mxu0
      %v539 = vadd.f32 %v368, %v538
      %540 = vmatmul.f32.gmra.mxu0 %v429
      %v541 = vpop.f32.mrf.mxu0
      %v542 = vadd.f32 %v368, %v541
      %543 = vmatmul.f32.gmra.mxu0 %v432
      %v544 = vpop.f32.mrf.mxu0
      %v545 = vadd.f32 %v368, %v544
      %546 = vmatmul.f32.gmra.mxu0 %v435
      %v547 = vpop.f32.mrf.mxu0
      %v548 = vadd.f32 %v368, %v547
      %549 = vmatmul.f32.gmra.mxu0 %v438
      %v550 = vpop.f32.mrf.mxu0
      %v551 = vadd.f32 %v368, %v550
      %552 = vmatmul.f32.gmra.mxu0 %v441
      %v553 = vpop.f32.mrf.mxu0
      %v554 = vadd.f32 %v368, %v553
      %555 = vmatmul.f32.gmra.mxu0 %v444
      %v556 = vpop.f32.mrf.mxu0
      %v557 = vadd.f32 %v368, %v556
      %558 = vmatmul.f32.gmra.mxu0 %v447
      %v559 = vpop.f32.mrf.mxu0
      %v560 = vadd.f32 %v368, %v559
      %561 = vmatmul.f32.gmra.mxu0 %v450
      %v562 = vpop.f32.mrf.mxu0
      %v563 = vadd.f32 %v368, %v562
      %564 = vmatmul.f32.gmra.mxu0 %v453
      %v565 = vpop.f32.mrf.mxu0
      %v566 = vadd.f32 %v368, %v565
      %567 = vmatmul.f32.gmra.mxu0 %v456
      %v568 = vpop.f32.mrf.mxu0
      %v569 = vadd.f32 %v368, %v568
      %570 = vmatmul.f32.gmra.mxu0 %v459
      %v571 = vpop.f32.mrf.mxu0
      %v572 = vadd.f32 %v368, %v571
      %573 = vmatmul.f32.gmra.mxu0 %v462
      %v574 = vpop.f32.mrf.mxu0
      %v575 = vadd.f32 %v368, %v574
      %576 = vmatmul.f32.gmra.mxu0 %v465
      %v577 = vpop.f32.mrf.mxu0
      %v578 = vadd.f32 %v368, %v577
      %579 = vdwg.mxu0
      %v580 = vmax.f32 %v485, 0.0
      %v581 = vmax.f32 %v488, 0.0
      %v582 = vmax.f32 %v491, 0.0
      %v583 = vmax.f32 %v494, 0.0
      %v584 = vmax.f32 %v497, 0.0
      %v585 = vmax.f32 %v500, 0.0
      %v586 = vmax.f32 %v503, 0.0
      %v587 = vmax.f32 %v506, 0.0
      %v588 = vmax.f32 %v509, 0.0
      %v589 = vmax.f32 %v512, 0.0
      %v590 = vmax.f32 %v515, 0.0
      %v591 = vmax.f32 %v518, 0.0
      %v592 = vmax.f32 %v521, 0.0
      %v593 = vmax.f32 %v524, 0.0
      %v594 = vmax.f32 %v527, 0.0
      %v595 = vmax.f32 %v530, 0.0
      %v596 = vmax.f32 %v533, 0.0
      %v597 = vmax.f32 %v536, 0.0
      %v598 = vmax.f32 %v539, 0.0
      %v599 = vmax.f32 %v542, 0.0
      %v600 = vmax.f32 %v545, 0.0
      %v601 = vmax.f32 %v548, 0.0
      %v602 = vmax.f32 %v551, 0.0
      %v603 = vmax.f32 %v554, 0.0
      %v604 = vmax.f32 %v557, 0.0
      %v605 = vmax.f32 %v560, 0.0
      %v606 = vmax.f32 %v563, 0.0
      %v607 = vmax.f32 %v566, 0.0
      %v608 = vmax.f32 %v569, 0.0
      %v609 = vmax.f32 %v572, 0.0
      %v610 = vmax.f32 %v575, 0.0
      %v611 = vmax.f32 %v578, 0.0
      %vm612 = vcmask 130048
      %613 = vst.msk [vmem:[#allocation2] sm:$0xff] %vm612, 0.0
      %614 = vst.msk [vmem:[#allocation2 + $0x8] sm:$0xff] %vm612, 0.0
      %vm615 = vcmask 123904
      %616 = vst.msk [vmem:[#allocation2 + $0x10] sm:$0x3] %vm615, 0.0
      %s617 = scalar_lea.vmem [#allocation2], 408
      %618 = vst.msk [vmem:[%s617] sm:$0xff] %vm612, 0.0
      %619 = vst.msk [vmem:[%s617 + $0x8] sm:$0xff] %vm612, 0.0
      %620 = vst.msk [vmem:[%s617 + $0x10] sm:$0x3] %vm615, 0.0
      %s621 = scalar_lea.vmem [#allocation2], 24
      %vm622 = vcmask 122880
      %623 = vst.msk [vmem:[%s621] sm:$0x1] %vm622, 0.0
      %624 = vst.msk [vmem:[%s621 + $0x18] sm:$0x1] %vm622, 0.0
      %625 = vst.msk [vmem:[%s621 + $0x30] sm:$0x1] %vm622, 0.0
      %626 = vst.msk [vmem:[%s621 + $0x48] sm:$0x1] %vm622, 0.0
      %627 = vst.msk [vmem:[%s621 + $0x60] sm:$0x1] %vm622, 0.0
      %628 = vst.msk [vmem:[%s621 + $0x78] sm:$0x1] %vm622, 0.0
      %629 = vst.msk [vmem:[%s621 + $0x90] sm:$0x1] %vm622, 0.0
      %630 = vst.msk [vmem:[%s621 + $0xa8] sm:$0x1] %vm622, 0.0
      %631 = vst.msk [vmem:[%s621 + $0xc0] sm:$0x1] %vm622, 0.0
      %632 = vst.msk [vmem:[%s621 + $0xd8] sm:$0x1] %vm622, 0.0
      %633 = vst.msk [vmem:[%s621 + $0xf0] sm:$0x1] %vm622, 0.0
      %634 = vst.msk [vmem:[%s621 + $0x108] sm:$0x1] %vm622, 0.0
      %635 = vst.msk [vmem:[%s621 + $0x120] sm:$0x1] %vm622, 0.0
      %636 = vst.msk [vmem:[%s621 + $0x138] sm:$0x1] %vm622, 0.0
      %637 = vst.msk [vmem:[%s621 + $0x150] sm:$0x1] %vm622, 0.0
      %638 = vst.msk [vmem:[%s621 + $0x168] sm:$0x1] %vm622, 0.0
      %639 = vst.msk [vmem:[%s621 + $0x11] sm:$0x1] %vm622, 0.0
      %640 = vst.msk [vmem:[%s621 + $0x29] sm:$0x1] %vm622, 0.0
      %641 = vst.msk [vmem:[%s621 + $0x41] sm:$0x1] %vm622, 0.0
      %642 = vst.msk [vmem:[%s621 + $0x59] sm:$0x1] %vm622, 0.0
      %643 = vst.msk [vmem:[%s621 + $0x71] sm:$0x1] %vm622, 0.0
      %644 = vst.msk [vmem:[%s621 + $0x89] sm:$0x1] %vm622, 0.0
      %645 = vst.msk [vmem:[%s621 + $0xa1] sm:$0x1] %vm622, 0.0
      %646 = vst.msk [vmem:[%s621 + $0xb9] sm:$0x1] %vm622, 0.0
      %647 = vst.msk [vmem:[%s621 + $0xd1] sm:$0x1] %vm622, 0.0
      %648 = vst.msk [vmem:[%s621 + $0xe9] sm:$0x1] %vm622, 0.0
      %649 = vst.msk [vmem:[%s621 + $0x101] sm:$0x1] %vm622, 0.0
      %650 = vst.msk [vmem:[%s621 + $0x119] sm:$0x1] %vm622, 0.0
      %651 = vst.msk [vmem:[%s621 + $0x131] sm:$0x1] %vm622, 0.0
      %652 = vst.msk [vmem:[%s621 + $0x149] sm:$0x1] %vm622, 0.0
      %653 = vst.msk [vmem:[%s621 + $0x161] sm:$0x1] %vm622, 0.0
      %654 = vst.msk [vmem:[%s621 + $0x179] sm:$0x1] %vm622, 0.0
      %655 = vst.msk [vmem:[%s621 + $0x1] sm:$0xff] %vm612, %v580
      %656 = vst.msk [vmem:[%s621 + $0x9] sm:$0xff] %vm612, %v581
      %657 = vst.msk [vmem:[%s621 + $0x19] sm:$0xff] %vm612, %v582
      %658 = vst.msk [vmem:[%s621 + $0x21] sm:$0xff] %vm612, %v583
      %659 = vst.msk [vmem:[%s621 + $0x31] sm:$0xff] %vm612, %v584
      %660 = vst.msk [vmem:[%s621 + $0x39] sm:$0xff] %vm612, %v585
      %661 = vst.msk [vmem:[%s621 + $0x49] sm:$0xff] %vm612, %v586
      %662 = vst.msk [vmem:[%s621 + $0x51] sm:$0xff] %vm612, %v587
      %663 = vst.msk [vmem:[%s621 + $0x61] sm:$0xff] %vm612, %v588
      %664 = vst.msk [vmem:[%s621 + $0x69] sm:$0xff] %vm612, %v589
      %665 = vst.msk [vmem:[%s621 + $0x79] sm:$0xff] %vm612, %v590
      %666 = vst.msk [vmem:[%s621 + $0x81] sm:$0xff] %vm612, %v591
      %667 = vst.msk [vmem:[%s621 + $0x91] sm:$0xff] %vm612, %v592
      %668 = vst.msk [vmem:[%s621 + $0x99] sm:$0xff] %vm612, %v593
      %669 = vst.msk [vmem:[%s621 + $0xa9] sm:$0xff] %vm612, %v594
      %670 = vst.msk [vmem:[%s621 + $0xb1] sm:$0xff] %vm612, %v595
      %671 = vst.msk [vmem:[%s621 + $0xc1] sm:$0xff] %vm612, %v596
      %672 = vst.msk [vmem:[%s621 + $0xc9] sm:$0xff] %vm612, %v597
      %673 = vst.msk [vmem:[%s621 + $0xd9] sm:$0xff] %vm612, %v598
      %674 = vst.msk [vmem:[%s621 + $0xe1] sm:$0xff] %vm612, %v599
      %675 = vst.msk [vmem:[%s621 + $0xf1] sm:$0xff] %vm612, %v600
      %676 = vst.msk [vmem:[%s621 + $0xf9] sm:$0xff] %vm612, %v601
      %677 = vst.msk [vmem:[%s621 + $0x109] sm:$0xff] %vm612, %v602
      %678 = vst.msk [vmem:[%s621 + $0x111] sm:$0xff] %vm612, %v603
      %679 = vst.msk [vmem:[%s621 + $0x121] sm:$0xff] %vm612, %v604
      %680 = vst.msk [vmem:[%s621 + $0x129] sm:$0xff] %vm612, %v605
      %681 = vst.msk [vmem:[%s621 + $0x139] sm:$0xff] %vm612, %v606
      %682 = vst.msk [vmem:[%s621 + $0x141] sm:$0xff] %vm612, %v607
      %683 = vst.msk [vmem:[%s621 + $0x151] sm:$0xff] %vm612, %v608
      %684 = vst.msk [vmem:[%s621 + $0x159] sm:$0xff] %vm612, %v609
      %685 = vst.msk [vmem:[%s621 + $0x169] sm:$0xff] %vm612, %v610
      %686 = vst.msk [vmem:[%s621 + $0x171] sm:$0xff] %vm612, %v611
      %v687 = vld [vmem:[%s3] sm:$0xff]
      %v688 = vld [vmem:[%s3 + $0x8] sm:$0x1]
      %v689 = vld [vmem:[#allocation2] sm:$0xff]
      %v690 = vld [vmem:[#allocation2 + $0x8] sm:$0xff]
      %v691 = vld [vmem:[#allocation2 + $0x18] sm:$0xff]
      %v692 = vld [vmem:[#allocation2 + $0x20] sm:$0xff]
      %v693 = vld [vmem:[#allocation2 + $0x30] sm:$0xff]
      %v694 = vld [vmem:[#allocation2 + $0x38] sm:$0xff]
      %v695 = vld [vmem:[#allocation2 + $0x48] sm:$0xff]
      %v696 = vld [vmem:[#allocation2 + $0x50] sm:$0xff]
      %v697 = vld [vmem:[#allocation2 + $0x60] sm:$0xff]
      %v698 = vld [vmem:[#allocation2 + $0x68] sm:$0xff]
      %v699 = vld [vmem:[#allocation2 + $0x78] sm:$0xff]
      %v700 = vld [vmem:[#allocation2 + $0x80] sm:$0xff]
      %v701 = vld [vmem:[#allocation2 + $0x90] sm:$0xff]
      %v702 = vld [vmem:[#allocation2 + $0x98] sm:$0xff]
      %v703 = vld [vmem:[#allocation2 + $0xa8] sm:$0xff]
      %v704 = vld [vmem:[#allocation2 + $0xb0] sm:$0xff]
      %v705 = vld [vmem:[#allocation2 + $0xc0] sm:$0xff]
      %v706 = vld [vmem:[#allocation2 + $0xc8] sm:$0xff]
      %v707 = vld [vmem:[#allocation2 + $0xd8] sm:$0xff]
      %v708 = vld [vmem:[#allocation2 + $0xe0] sm:$0xff]
      %v709 = vld [vmem:[#allocation2 + $0xf0] sm:$0xff]
      %v710 = vld [vmem:[#allocation2 + $0xf8] sm:$0xff]
      %v711 = vld [vmem:[#allocation2 + $0x108] sm:$0xff]
      %v712 = vld [vmem:[#allocation2 + $0x110] sm:$0xff]
      %v713 = vld [vmem:[#allocation2 + $0x120] sm:$0xff]
      %v714 = vld [vmem:[#allocation2 + $0x128] sm:$0xff]
      %v715 = vld [vmem:[#allocation2 + $0x138] sm:$0xff]
      %v716 = vld [vmem:[#allocation2 + $0x140] sm:$0xff]
      %v717 = vld [vmem:[#allocation2 + $0x150] sm:$0xff]
      %v718 = vld [vmem:[#allocation2 + $0x158] sm:$0xff]
      %v719 = vld [vmem:[#allocation2 + $0x168] sm:$0xff]
      %v720 = vld [vmem:[#allocation2 + $0x170] sm:$0xff]
      %v721 = vperm.slane %v687, 0
      %v722 = vmul.f32 %v689, %v721
      %v723 = vmul.f32 %v690, %v721
      %v724 = vmul.f32 %v691, %v721
      %v725 = vmul.f32 %v692, %v721
      %v726 = vmul.f32 %v693, %v721
      %v727 = vmul.f32 %v694, %v721
      %v728 = vmul.f32 %v695, %v721
      %v729 = vmul.f32 %v696, %v721
      %v730 = vmul.f32 %v697, %v721
      %v731 = vmul.f32 %v698, %v721
      %v732 = vmul.f32 %v699, %v721
      %v733 = vmul.f32 %v700, %v721
      %v734 = vmul.f32 %v701, %v721
      %v735 = vmul.f32 %v702, %v721
      %v736 = vmul.f32 %v703, %v721
      %v737 = vmul.f32 %v704, %v721
      %v738 = vmul.f32 %v705, %v721
      %v739 = vmul.f32 %v706, %v721
      %v740 = vmul.f32 %v707, %v721
      %v741 = vmul.f32 %v708, %v721
      %v742 = vmul.f32 %v709, %v721
      %v743 = vmul.f32 %v710, %v721
      %v744 = vmul.f32 %v711, %v721
      %v745 = vmul.f32 %v712, %v721
      %v746 = vmul.f32 %v713, %v721
      %v747 = vmul.f32 %v714, %v721
      %v748 = vmul.f32 %v715, %v721
      %v749 = vmul.f32 %v716, %v721
      %v750 = vmul.f32 %v717, %v721
      %v751 = vmul.f32 %v718, %v721
      %v752 = vmul.f32 %v719, %v721
      %v753 = vmul.f32 %v720, %v721
      %v754 = vadd.f32 %v722, 0.0
      %v755 = vadd.f32 %v723, 0.0
      %v756 = vadd.f32 %v724, 0.0
      %v757 = vadd.f32 %v725, 0.0
      %v758 = vadd.f32 %v726, 0.0
      %v759 = vadd.f32 %v727, 0.0
      %v760 = vadd.f32 %v728, 0.0
      %v761 = vadd.f32 %v729, 0.0
      %v762 = vadd.f32 %v730, 0.0
      %v763 = vadd.f32 %v731, 0.0
      %v764 = vadd.f32 %v732, 0.0
      %v765 = vadd.f32 %v733, 0.0
      %v766 = vadd.f32 %v734, 0.0
      %v767 = vadd.f32 %v735, 0.0
      %v768 = vadd.f32 %v736, 0.0
      %v769 = vadd.f32 %v737, 0.0
      %v770 = vadd.f32 %v738, 0.0
      %v771 = vadd.f32 %v739, 0.0
      %v772 = vadd.f32 %v740, 0.0
      %v773 = vadd.f32 %v741, 0.0
      %v774 = vadd.f32 %v742, 0.0
      %v775 = vadd.f32 %v743, 0.0
      %v776 = vadd.f32 %v744, 0.0
      %v777 = vadd.f32 %v745, 0.0
      %v778 = vadd.f32 %v746, 0.0
      %v779 = vadd.f32 %v747, 0.0
      %v780 = vadd.f32 %v748, 0.0
      %v781 = vadd.f32 %v749, 0.0
      %v782 = vadd.f32 %v750, 0.0
      %v783 = vadd.f32 %v751, 0.0
      %v784 = vadd.f32 %v752, 0.0
      %v785 = vadd.f32 %v753, 0.0
      %v786 = vld [vmem:[#allocation2 + $0x1] sm:$0xff]
      %v787 = vld [vmem:[#allocation2 + $0x9] sm:$0xff]
      %v788 = vld [vmem:[#allocation2 + $0x19] sm:$0xff]
      %v789 = vld [vmem:[#allocation2 + $0x21] sm:$0xff]
      %v790 = vld [vmem:[#allocation2 + $0x31] sm:$0xff]
      %v791 = vld [vmem:[#allocation2 + $0x39] sm:$0xff]
      %v792 = vld [vmem:[#allocation2 + $0x49] sm:$0xff]
      %v793 = vld [vmem:[#allocation2 + $0x51] sm:$0xff]
      %v794 = vld [vmem:[#allocation2 + $0x61] sm:$0xff]
      %v795 = vld [vmem:[#allocation2 + $0x69] sm:$0xff]
      %v796 = vld [vmem:[#allocation2 + $0x79] sm:$0xff]
      %v797 = vld [vmem:[#allocation2 + $0x81] sm:$0xff]
      %v798 = vld [vmem:[#allocation2 + $0x91] sm:$0xff]
      %v799 = vld [vmem:[#allocation2 + $0x99] sm:$0xff]
      %v800 = vld [vmem:[#allocation2 + $0xa9] sm:$0xff]
      %v801 = vld [vmem:[#allocation2 + $0xb1] sm:$0xff]
      %v802 = vld [vmem:[#allocation2 + $0xc1] sm:$0xff]
      %v803 = vld [vmem:[#allocation2 + $0xc9] sm:$0xff]
      %v804 = vld [vmem:[#allocation2 + $0xd9] sm:$0xff]
      %v805 = vld [vmem:[#allocation2 + $0xe1] sm:$0xff]
      %v806 = vld [vmem:[#allocation2 + $0xf1] sm:$0xff]
      %v807 = vld [vmem:[#allocation2 + $0xf9] sm:$0xff]
      %v808 = vld [vmem:[#allocation2 + $0x109] sm:$0xff]
      %v809 = vld [vmem:[#allocation2 + $0x111] sm:$0xff]
      %v810 = vld [vmem:[#allocation2 + $0x121] sm:$0xff]
      %v811 = vld [vmem:[#allocation2 + $0x129] sm:$0xff]
      %v812 = vld [vmem:[#allocation2 + $0x139] sm:$0xff]
      %v813 = vld [vmem:[#allocation2 + $0x141] sm:$0xff]
      %v814 = vld [vmem:[#allocation2 + $0x151] sm:$0xff]
      %v815 = vld [vmem:[#allocation2 + $0x159] sm:$0xff]
      %v816 = vld [vmem:[#allocation2 + $0x169] sm:$0xff]
      %v817 = vld [vmem:[#allocation2 + $0x171] sm:$0xff]
      %v818 = vperm.slane %v687, 1
      %v819 = vmul.f32 %v786, %v818
      %v820 = vmul.f32 %v787, %v818
      %v821 = vmul.f32 %v788, %v818
      %v822 = vmul.f32 %v789, %v818
      %v823 = vmul.f32 %v790, %v818
      %v824 = vmul.f32 %v791, %v818
      %v825 = vmul.f32 %v792, %v818
      %v826 = vmul.f32 %v793, %v818
      %v827 = vmul.f32 %v794, %v818
      %v828 = vmul.f32 %v795, %v818
      %v829 = vmul.f32 %v796, %v818
      %v830 = vmul.f32 %v797, %v818
      %v831 = vmul.f32 %v798, %v818
      %v832 = vmul.f32 %v799, %v818
      %v833 = vmul.f32 %v800, %v818
      %v834 = vmul.f32 %v801, %v818
      %v835 = vmul.f32 %v802, %v818
      %v836 = vmul.f32 %v803, %v818
      %v837 = vmul.f32 %v804, %v818
      %v838 = vmul.f32 %v805, %v818
      %v839 = vmul.f32 %v806, %v818
      %v840 = vmul.f32 %v807, %v818
      %v841 = vmul.f32 %v808, %v818
      %v842 = vmul.f32 %v809, %v818
      %v843 = vmul.f32 %v810, %v818
      %v844 = vmul.f32 %v811, %v818
      %v845 = vmul.f32 %v812, %v818
      %v846 = vmul.f32 %v813, %v818
      %v847 = vmul.f32 %v814, %v818
      %v848 = vmul.f32 %v815, %v818
      %v849 = vmul.f32 %v816, %v818
      %v850 = vmul.f32 %v817, %v818
      %v851 = vadd.f32 %v754, %v819
      %v852 = vadd.f32 %v755, %v820
      %v853 = vadd.f32 %v756, %v821
      %v854 = vadd.f32 %v757, %v822
      %v855 = vadd.f32 %v758, %v823
      %v856 = vadd.f32 %v759, %v824
      %v857 = vadd.f32 %v760, %v825
      %v858 = vadd.f32 %v761, %v826
      %v859 = vadd.f32 %v762, %v827
      %v860 = vadd.f32 %v763, %v828
      %v861 = vadd.f32 %v764, %v829
      %v862 = vadd.f32 %v765, %v830
      %v863 = vadd.f32 %v766, %v831
      %v864 = vadd.f32 %v767, %v832
      %v865 = vadd.f32 %v768, %v833
      %v866 = vadd.f32 %v769, %v834
      %v867 = vadd.f32 %v770, %v835
      %v868 = vadd.f32 %v771, %v836
      %v869 = vadd.f32 %v772, %v837
      %v870 = vadd.f32 %v773, %v838
      %v871 = vadd.f32 %v774, %v839
      %v872 = vadd.f32 %v775, %v840
      %v873 = vadd.f32 %v776, %v841
      %v874 = vadd.f32 %v777, %v842
      %v875 = vadd.f32 %v778, %v843
      %v876 = vadd.f32 %v779, %v844
      %v877 = vadd.f32 %v780, %v845
      %v878 = vadd.f32 %v781, %v846
      %v879 = vadd.f32 %v782, %v847
      %v880 = vadd.f32 %v783, %v848
      %v881 = vadd.f32 %v784, %v849
      %v882 = vadd.f32 %v785, %v850
      %v883 = vld [vmem:[#allocation2 + $0x2] sm:$0xff]
      %v884 = vld [vmem:[#allocation2 + $0xa] sm:$0xff]
      %v885 = vld [vmem:[#allocation2 + $0x1a] sm:$0xff]
      %v886 = vld [vmem:[#allocation2 + $0x22] sm:$0xff]
      %v887 = vld [vmem:[#allocation2 + $0x32] sm:$0xff]
      %v888 = vld [vmem:[#allocation2 + $0x3a] sm:$0xff]
      %v889 = vld [vmem:[#allocation2 + $0x4a] sm:$0xff]
      %v890 = vld [vmem:[#allocation2 + $0x52] sm:$0xff]
      %v891 = vld [vmem:[#allocation2 + $0x62] sm:$0xff]
      %v892 = vld [vmem:[#allocation2 + $0x6a] sm:$0xff]
      %v893 = vld [vmem:[#allocation2 + $0x7a] sm:$0xff]
      %v894 = vld [vmem:[#allocation2 + $0x82] sm:$0xff]
      %v895 = vld [vmem:[#allocation2 + $0x92] sm:$0xff]
      %v896 = vld [vmem:[#allocation2 + $0x9a] sm:$0xff]
      %v897 = vld [vmem:[#allocation2 + $0xaa] sm:$0xff]
      %v898 = vld [vmem:[#allocation2 + $0xb2] sm:$0xff]
      %v899 = vld [vmem:[#allocation2 + $0xc2] sm:$0xff]
      %v900 = vld [vmem:[#allocation2 + $0xca] sm:$0xff]
      %v901 = vld [vmem:[#allocation2 + $0xda] sm:$0xff]
      %v902 = vld [vmem:[#allocation2 + $0xe2] sm:$0xff]
      %v903 = vld [vmem:[#allocation2 + $0xf2] sm:$0xff]
      %v904 = vld [vmem:[#allocation2 + $0xfa] sm:$0xff]
      %v905 = vld [vmem:[#allocation2 + $0x10a] sm:$0xff]
      %v906 = vld [vmem:[#allocation2 + $0x112] sm:$0xff]
      %v907 = vld [vmem:[#allocation2 + $0x122] sm:$0xff]
      %v908 = vld [vmem:[#allocation2 + $0x12a] sm:$0xff]
      %v909 = vld [vmem:[#allocation2 + $0x13a] sm:$0xff]
      %v910 = vld [vmem:[#allocation2 + $0x142] sm:$0xff]
      %v911 = vld [vmem:[#allocation2 + $0x152] sm:$0xff]
      %v912 = vld [vmem:[#allocation2 + $0x15a] sm:$0xff]
      %v913 = vld [vmem:[#allocation2 + $0x16a] sm:$0xff]
      %v914 = vld [vmem:[#allocation2 + $0x172] sm:$0xff]
      %v915 = vperm.slane %v687, 2
      %v916 = vmul.f32 %v883, %v915
      %v917 = vmul.f32 %v884, %v915
      %v918 = vmul.f32 %v885, %v915
      %v919 = vmul.f32 %v886, %v915
      %v920 = vmul.f32 %v887, %v915
      %v921 = vmul.f32 %v888, %v915
      %v922 = vmul.f32 %v889, %v915
      %v923 = vmul.f32 %v890, %v915
      %v924 = vmul.f32 %v891, %v915
      %v925 = vmul.f32 %v892, %v915
      %v926 = vmul.f32 %v893, %v915
      %v927 = vmul.f32 %v894, %v915
      %v928 = vmul.f32 %v895, %v915
      %v929 = vmul.f32 %v896, %v915
      %v930 = vmul.f32 %v897, %v915
      %v931 = vmul.f32 %v898, %v915
      %v932 = vmul.f32 %v899, %v915
      %v933 = vmul.f32 %v900, %v915
      %v934 = vmul.f32 %v901, %v915
      %v935 = vmul.f32 %v902, %v915
      %v936 = vmul.f32 %v903, %v915
      %v937 = vmul.f32 %v904, %v915
      %v938 = vmul.f32 %v905, %v915
      %v939 = vmul.f32 %v906, %v915
      %v940 = vmul.f32 %v907, %v915
      %v941 = vmul.f32 %v908, %v915
      %v942 = vmul.f32 %v909, %v915
      %v943 = vmul.f32 %v910, %v915
      %v944 = vmul.f32 %v911, %v915
      %v945 = vmul.f32 %v912, %v915
      %v946 = vmul.f32 %v913, %v915
      %v947 = vmul.f32 %v914, %v915
      %v948 = vadd.f32 %v851, %v916
      %v949 = vadd.f32 %v852, %v917
      %v950 = vadd.f32 %v853, %v918
      %v951 = vadd.f32 %v854, %v919
      %v952 = vadd.f32 %v855, %v920
      %v953 = vadd.f32 %v856, %v921
      %v954 = vadd.f32 %v857, %v922
      %v955 = vadd.f32 %v858, %v923
      %v956 = vadd.f32 %v859, %v924
      %v957 = vadd.f32 %v860, %v925
      %v958 = vadd.f32 %v861, %v926
      %v959 = vadd.f32 %v862, %v927
      %v960 = vadd.f32 %v863, %v928
      %v961 = vadd.f32 %v864, %v929
      %v962 = vadd.f32 %v865, %v930
      %v963 = vadd.f32 %v866, %v931
      %v964 = vadd.f32 %v867, %v932
      %v965 = vadd.f32 %v868, %v933
      %v966 = vadd.f32 %v869, %v934
      %v967 = vadd.f32 %v870, %v935
      %v968 = vadd.f32 %v871, %v936
      %v969 = vadd.f32 %v872, %v937
      %v970 = vadd.f32 %v873, %v938
      %v971 = vadd.f32 %v874, %v939
      %v972 = vadd.f32 %v875, %v940
      %v973 = vadd.f32 %v876, %v941
      %v974 = vadd.f32 %v877, %v942
      %v975 = vadd.f32 %v878, %v943
      %v976 = vadd.f32 %v879, %v944
      %v977 = vadd.f32 %v880, %v945
      %v978 = vadd.f32 %v881, %v946
      %v979 = vadd.f32 %v882, %v947
      %v980 = vld [vmem:[%s621] sm:$0xff]
      %v981 = vld [vmem:[%s621 + $0x8] sm:$0xff]
      %v982 = vld [vmem:[%s621 + $0x18] sm:$0xff]
      %v983 = vld [vmem:[%s621 + $0x20] sm:$0xff]
      %v984 = vld [vmem:[%s621 + $0x30] sm:$0xff]
      %v985 = vld [vmem:[%s621 + $0x38] sm:$0xff]
      %v986 = vld [vmem:[%s621 + $0x48] sm:$0xff]
      %v987 = vld [vmem:[%s621 + $0x50] sm:$0xff]
      %v988 = vld [vmem:[%s621 + $0x60] sm:$0xff]
      %v989 = vld [vmem:[%s621 + $0x68] sm:$0xff]
      %v990 = vld [vmem:[%s621 + $0x78] sm:$0xff]
      %v991 = vld [vmem:[%s621 + $0x80] sm:$0xff]
      %v992 = vld [vmem:[%s621 + $0x90] sm:$0xff]
      %v993 = vld [vmem:[%s621 + $0x98] sm:$0xff]
      %v994 = vld [vmem:[%s621 + $0xa8] sm:$0xff]
      %v995 = vld [vmem:[%s621 + $0xb0] sm:$0xff]
      %v996 = vld [vmem:[%s621 + $0xc0] sm:$0xff]
      %v997 = vld [vmem:[%s621 + $0xc8] sm:$0xff]
      %v998 = vld [vmem:[%s621 + $0xd8] sm:$0xff]
      %v999 = vld [vmem:[%s621 + $0xe0] sm:$0xff]
      %v1000 = vld [vmem:[%s621 + $0xf0] sm:$0xff]
      %v1001 = vld [vmem:[%s621 + $0xf8] sm:$0xff]
      %v1002 = vld [vmem:[%s621 + $0x108] sm:$0xff]
      %v1003 = vld [vmem:[%s621 + $0x110] sm:$0xff]
      %v1004 = vld [vmem:[%s621 + $0x120] sm:$0xff]
      %v1005 = vld [vmem:[%s621 + $0x128] sm:$0xff]
      %v1006 = vld [vmem:[%s621 + $0x138] sm:$0xff]
      %v1007 = vld [vmem:[%s621 + $0x140] sm:$0xff]
      %v1008 = vld [vmem:[%s621 + $0x150] sm:$0xff]
      %v1009 = vld [vmem:[%s621 + $0x158] sm:$0xff]
      %v1010 = vld [vmem:[%s621 + $0x168] sm:$0xff]
      %v1011 = vld [vmem:[%s621 + $0x170] sm:$0xff]
      %v1012 = vperm.slane %v687, 3
      %v1013 = vmul.f32 %v980, %v1012
      %v1014 = vmul.f32 %v981, %v1012
      %v1015 = vmul.f32 %v982, %v1012
      %v1016 = vmul.f32 %v983, %v1012
      %v1017 = vmul.f32 %v984, %v1012
      %v1018 = vmul.f32 %v985, %v1012
      %v1019 = vmul.f32 %v986, %v1012
      %v1020 = vmul.f32 %v987, %v1012
      %v1021 = vmul.f32 %v988, %v1012
      %v1022 = vmul.f32 %v989, %v1012
      %v1023 = vmul.f32 %v990, %v1012
      %v1024 = vmul.f32 %v991, %v1012
      %v1025 = vmul.f32 %v992, %v1012
      %v1026 = vmul.f32 %v993, %v1012
      %v1027 = vmul.f32 %v994, %v1012
      %v1028 = vmul.f32 %v995, %v1012
      %v1029 = vmul.f32 %v996, %v1012
      %v1030 = vmul.f32 %v997, %v1012
      %v1031 = vmul.f32 %v998, %v1012
      %v1032 = vmul.f32 %v999, %v1012
      %v1033 = vmul.f32 %v1000, %v1012
      %v1034 = vmul.f32 %v1001, %v1012
      %v1035 = vmul.f32 %v1002, %v1012
      %v1036 = vmul.f32 %v1003, %v1012
      %v1037 = vmul.f32 %v1004, %v1012
      %v1038 = vmul.f32 %v1005, %v1012
      %v1039 = vmul.f32 %v1006, %v1012
      %v1040 = vmul.f32 %v1007, %v1012
      %v1041 = vmul.f32 %v1008, %v1012
      %v1042 = vmul.f32 %v1009, %v1012
      %v1043 = vmul.f32 %v1010, %v1012
      %v1044 = vmul.f32 %v1011, %v1012
      %v1045 = vadd.f32 %v948, %v1013
      %v1046 = vadd.f32 %v949, %v1014
      %v1047 = vadd.f32 %v950, %v1015
      %v1048 = vadd.f32 %v951, %v1016
      %v1049 = vadd.f32 %v952, %v1017
      %v1050 = vadd.f32 %v953, %v1018
      %v1051 = vadd.f32 %v954, %v1019
      %v1052 = vadd.f32 %v955, %v1020
      %v1053 = vadd.f32 %v956, %v1021
      %v1054 = vadd.f32 %v957, %v1022
      %v1055 = vadd.f32 %v958, %v1023
      %v1056 = vadd.f32 %v959, %v1024
      %v1057 = vadd.f32 %v960, %v1025
      %v1058 = vadd.f32 %v961, %v1026
      %v1059 = vadd.f32 %v962, %v1027
      %v1060 = vadd.f32 %v963, %v1028
      %v1061 = vadd.f32 %v964, %v1029
      %v1062 = vadd.f32 %v965, %v1030
      %v1063 = vadd.f32 %v966, %v1031
      %v1064 = vadd.f32 %v967, %v1032
      %v1065 = vadd.f32 %v968, %v1033
      %v1066 = vadd.f32 %v969, %v1034
      %v1067 = vadd.f32 %v970, %v1035
      %v1068 = vadd.f32 %v971, %v1036
      %v1069 = vadd.f32 %v972, %v1037
      %v1070 = vadd.f32 %v973, %v1038
      %v1071 = vadd.f32 %v974, %v1039
      %v1072 = vadd.f32 %v975, %v1040
      %v1073 = vadd.f32 %v976, %v1041
      %v1074 = vadd.f32 %v977, %v1042
      %v1075 = vadd.f32 %v978, %v1043
      %v1076 = vadd.f32 %v979, %v1044
      %v1077 = vld [vmem:[%s621 + $0x1] sm:$0xff]
      %v1078 = vld [vmem:[%s621 + $0x9] sm:$0xff]
      %v1079 = vld [vmem:[%s621 + $0x19] sm:$0xff]
      %v1080 = vld [vmem:[%s621 + $0x21] sm:$0xff]
      %v1081 = vld [vmem:[%s621 + $0x31] sm:$0xff]
      %v1082 = vld [vmem:[%s621 + $0x39] sm:$0xff]
      %v1083 = vld [vmem:[%s621 + $0x49] sm:$0xff]
      %v1084 = vld [vmem:[%s621 + $0x51] sm:$0xff]
      %v1085 = vld [vmem:[%s621 + $0x61] sm:$0xff]
      %v1086 = vld [vmem:[%s621 + $0x69] sm:$0xff]
      %v1087 = vld [vmem:[%s621 + $0x79] sm:$0xff]
      %v1088 = vld [vmem:[%s621 + $0x81] sm:$0xff]
      %v1089 = vld [vmem:[%s621 + $0x91] sm:$0xff]
      %v1090 = vld [vmem:[%s621 + $0x99] sm:$0xff]
      %v1091 = vld [vmem:[%s621 + $0xa9] sm:$0xff]
      %v1092 = vld [vmem:[%s621 + $0xb1] sm:$0xff]
      %v1093 = vld [vmem:[%s621 + $0xc1] sm:$0xff]
      %v1094 = vld [vmem:[%s621 + $0xc9] sm:$0xff]
      %v1095 = vld [vmem:[%s621 + $0xd9] sm:$0xff]
      %v1096 = vld [vmem:[%s621 + $0xe1] sm:$0xff]
      %v1097 = vld [vmem:[%s621 + $0xf1] sm:$0xff]
      %v1098 = vld [vmem:[%s621 + $0xf9] sm:$0xff]
      %v1099 = vld [vmem:[%s621 + $0x109] sm:$0xff]
      %v1100 = vld [vmem:[%s621 + $0x111] sm:$0xff]
      %v1101 = vld [vmem:[%s621 + $0x121] sm:$0xff]
      %v1102 = vld [vmem:[%s621 + $0x129] sm:$0xff]
      %v1103 = vld [vmem:[%s621 + $0x139] sm:$0xff]
      %v1104 = vld [vmem:[%s621 + $0x141] sm:$0xff]
      %v1105 = vld [vmem:[%s621 + $0x151] sm:$0xff]
      %v1106 = vld [vmem:[%s621 + $0x159] sm:$0xff]
      %v1107 = vld [vmem:[%s621 + $0x169] sm:$0xff]
      %v1108 = vld [vmem:[%s621 + $0x171] sm:$0xff]
      %v1109 = vperm.slane %v687, 4
      %v1110 = vmul.f32 %v1077, %v1109
      %v1111 = vmul.f32 %v1078, %v1109
      %v1112 = vmul.f32 %v1079, %v1109
      %v1113 = vmul.f32 %v1080, %v1109
      %v1114 = vmul.f32 %v1081, %v1109
      %v1115 = vmul.f32 %v1082, %v1109
      %v1116 = vmul.f32 %v1083, %v1109
      %v1117 = vmul.f32 %v1084, %v1109
      %v1118 = vmul.f32 %v1085, %v1109
      %v1119 = vmul.f32 %v1086, %v1109
      %v1120 = vmul.f32 %v1087, %v1109
      %v1121 = vmul.f32 %v1088, %v1109
      %v1122 = vmul.f32 %v1089, %v1109
      %v1123 = vmul.f32 %v1090, %v1109
      %v1124 = vmul.f32 %v1091, %v1109
      %v1125 = vmul.f32 %v1092, %v1109
      %v1126 = vmul.f32 %v1093, %v1109
      %v1127 = vmul.f32 %v1094, %v1109
      %v1128 = vmul.f32 %v1095, %v1109
      %v1129 = vmul.f32 %v1096, %v1109
      %v1130 = vmul.f32 %v1097, %v1109
      %v1131 = vmul.f32 %v1098, %v1109
      %v1132 = vmul.f32 %v1099, %v1109
      %v1133 = vmul.f32 %v1100, %v1109
      %v1134 = vmul.f32 %v1101, %v1109
      %v1135 = vmul.f32 %v1102, %v1109
      %v1136 = vmul.f32 %v1103, %v1109
      %v1137 = vmul.f32 %v1104, %v1109
      %v1138 = vmul.f32 %v1105, %v1109
      %v1139 = vmul.f32 %v1106, %v1109
      %v1140 = vmul.f32 %v1107, %v1109
      %v1141 = vmul.f32 %v1108, %v1109
      %v1142 = vadd.f32 %v1045, %v1110
      %v1143 = vadd.f32 %v1046, %v1111
      %v1144 = vadd.f32 %v1047, %v1112
      %v1145 = vadd.f32 %v1048, %v1113
      %v1146 = vadd.f32 %v1049, %v1114
      %v1147 = vadd.f32 %v1050, %v1115
      %v1148 = vadd.f32 %v1051, %v1116
      %v1149 = vadd.f32 %v1052, %v1117
      %v1150 = vadd.f32 %v1053, %v1118
      %v1151 = vadd.f32 %v1054, %v1119
      %v1152 = vadd.f32 %v1055, %v1120
      %v1153 = vadd.f32 %v1056, %v1121
      %v1154 = vadd.f32 %v1057, %v1122
      %v1155 = vadd.f32 %v1058, %v1123
      %v1156 = vadd.f32 %v1059, %v1124
      %v1157 = vadd.f32 %v1060, %v1125
      %v1158 = vadd.f32 %v1061, %v1126
      %v1159 = vadd.f32 %v1062, %v1127
      %v1160 = vadd.f32 %v1063, %v1128
      %v1161 = vadd.f32 %v1064, %v1129
      %v1162 = vadd.f32 %v1065, %v1130
      %v1163 = vadd.f32 %v1066, %v1131
      %v1164 = vadd.f32 %v1067, %v1132
      %v1165 = vadd.f32 %v1068, %v1133
      %v1166 = vadd.f32 %v1069, %v1134
      %v1167 = vadd.f32 %v1070, %v1135
      %v1168 = vadd.f32 %v1071, %v1136
      %v1169 = vadd.f32 %v1072, %v1137
      %v1170 = vadd.f32 %v1073, %v1138
      %v1171 = vadd.f32 %v1074, %v1139
      %v1172 = vadd.f32 %v1075, %v1140
      %v1173 = vadd.f32 %v1076, %v1141
      %v1174 = vld [vmem:[%s621 + $0x2] sm:$0xff]
      %v1175 = vld [vmem:[%s621 + $0xa] sm:$0xff]
      %v1176 = vld [vmem:[%s621 + $0x1a] sm:$0xff]
      %v1177 = vld [vmem:[%s621 + $0x22] sm:$0xff]
      %v1178 = vld [vmem:[%s621 + $0x32] sm:$0xff]
      %v1179 = vld [vmem:[%s621 + $0x3a] sm:$0xff]
      %v1180 = vld [vmem:[%s621 + $0x4a] sm:$0xff]
      %v1181 = vld [vmem:[%s621 + $0x52] sm:$0xff]
      %v1182 = vld [vmem:[%s621 + $0x62] sm:$0xff]
      %v1183 = vld [vmem:[%s621 + $0x6a] sm:$0xff]
      %v1184 = vld [vmem:[%s621 + $0x7a] sm:$0xff]
      %v1185 = vld [vmem:[%s621 + $0x82] sm:$0xff]
      %v1186 = vld [vmem:[%s621 + $0x92] sm:$0xff]
      %v1187 = vld [vmem:[%s621 + $0x9a] sm:$0xff]
      %v1188 = vld [vmem:[%s621 + $0xaa] sm:$0xff]
      %v1189 = vld [vmem:[%s621 + $0xb2] sm:$0xff]
      %v1190 = vld [vmem:[%s621 + $0xc2] sm:$0xff]
      %v1191 = vld [vmem:[%s621 + $0xca] sm:$0xff]
      %v1192 = vld [vmem:[%s621 + $0xda] sm:$0xff]
      %v1193 = vld [vmem:[%s621 + $0xe2] sm:$0xff]
      %v1194 = vld [vmem:[%s621 + $0xf2] sm:$0xff]
      %v1195 = vld [vmem:[%s621 + $0xfa] sm:$0xff]
      %v1196 = vld [vmem:[%s621 + $0x10a] sm:$0xff]
      %v1197 = vld [vmem:[%s621 + $0x112] sm:$0xff]
      %v1198 = vld [vmem:[%s621 + $0x122] sm:$0xff]
      %v1199 = vld [vmem:[%s621 + $0x12a] sm:$0xff]
      %v1200 = vld [vmem:[%s621 + $0x13a] sm:$0xff]
      %v1201 = vld [vmem:[%s621 + $0x142] sm:$0xff]
      %v1202 = vld [vmem:[%s621 + $0x152] sm:$0xff]
      %v1203 = vld [vmem:[%s621 + $0x15a] sm:$0xff]
      %v1204 = vld [vmem:[%s621 + $0x16a] sm:$0xff]
      %v1205 = vld [vmem:[%s621 + $0x172] sm:$0xff]
      %v1206 = vperm.slane %v687, 5
      %v1207 = vmul.f32 %v1174, %v1206
      %v1208 = vmul.f32 %v1175, %v1206
      %v1209 = vmul.f32 %v1176, %v1206
      %v1210 = vmul.f32 %v1177, %v1206
      %v1211 = vmul.f32 %v1178, %v1206
      %v1212 = vmul.f32 %v1179, %v1206
      %v1213 = vmul.f32 %v1180, %v1206
      %v1214 = vmul.f32 %v1181, %v1206
      %v1215 = vmul.f32 %v1182, %v1206
      %v1216 = vmul.f32 %v1183, %v1206
      %v1217 = vmul.f32 %v1184, %v1206
      %v1218 = vmul.f32 %v1185, %v1206
      %v1219 = vmul.f32 %v1186, %v1206
      %v1220 = vmul.f32 %v1187, %v1206
      %v1221 = vmul.f32 %v1188, %v1206
      %v1222 = vmul.f32 %v1189, %v1206
      %v1223 = vmul.f32 %v1190, %v1206
      %v1224 = vmul.f32 %v1191, %v1206
      %v1225 = vmul.f32 %v1192, %v1206
      %v1226 = vmul.f32 %v1193, %v1206
      %v1227 = vmul.f32 %v1194, %v1206
      %v1228 = vmul.f32 %v1195, %v1206
      %v1229 = vmul.f32 %v1196, %v1206
      %v1230 = vmul.f32 %v1197, %v1206
      %v1231 = vmul.f32 %v1198, %v1206
      %v1232 = vmul.f32 %v1199, %v1206
      %v1233 = vmul.f32 %v1200, %v1206
      %v1234 = vmul.f32 %v1201, %v1206
      %v1235 = vmul.f32 %v1202, %v1206
      %v1236 = vmul.f32 %v1203, %v1206
      %v1237 = vmul.f32 %v1204, %v1206
      %v1238 = vmul.f32 %v1205, %v1206
      %v1239 = vadd.f32 %v1142, %v1207
      %v1240 = vadd.f32 %v1143, %v1208
      %v1241 = vadd.f32 %v1144, %v1209
      %v1242 = vadd.f32 %v1145, %v1210
      %v1243 = vadd.f32 %v1146, %v1211
      %v1244 = vadd.f32 %v1147, %v1212
      %v1245 = vadd.f32 %v1148, %v1213
      %v1246 = vadd.f32 %v1149, %v1214
      %v1247 = vadd.f32 %v1150, %v1215
      %v1248 = vadd.f32 %v1151, %v1216
      %v1249 = vadd.f32 %v1152, %v1217
      %v1250 = vadd.f32 %v1153, %v1218
      %v1251 = vadd.f32 %v1154, %v1219
      %v1252 = vadd.f32 %v1155, %v1220
      %v1253 = vadd.f32 %v1156, %v1221
      %v1254 = vadd.f32 %v1157, %v1222
      %v1255 = vadd.f32 %v1158, %v1223
      %v1256 = vadd.f32 %v1159, %v1224
      %v1257 = vadd.f32 %v1160, %v1225
      %v1258 = vadd.f32 %v1161, %v1226
      %v1259 = vadd.f32 %v1162, %v1227
      %v1260 = vadd.f32 %v1163, %v1228
      %v1261 = vadd.f32 %v1164, %v1229
      %v1262 = vadd.f32 %v1165, %v1230
      %v1263 = vadd.f32 %v1166, %v1231
      %v1264 = vadd.f32 %v1167, %v1232
      %v1265 = vadd.f32 %v1168, %v1233
      %v1266 = vadd.f32 %v1169, %v1234
      %v1267 = vadd.f32 %v1170, %v1235
      %v1268 = vadd.f32 %v1171, %v1236
      %v1269 = vadd.f32 %v1172, %v1237
      %v1270 = vadd.f32 %v1173, %v1238
      %s1271 = scalar_lea.vmem [#allocation2], 48
      %v1272 = vld [vmem:[%s1271] sm:$0xff]
      %v1273 = vld [vmem:[%s1271 + $0x8] sm:$0xff]
      %v1274 = vld [vmem:[%s1271 + $0x18] sm:$0xff]
      %v1275 = vld [vmem:[%s1271 + $0x20] sm:$0xff]
      %v1276 = vld [vmem:[%s1271 + $0x30] sm:$0xff]
      %v1277 = vld [vmem:[%s1271 + $0x38] sm:$0xff]
      %v1278 = vld [vmem:[%s1271 + $0x48] sm:$0xff]
      %v1279 = vld [vmem:[%s1271 + $0x50] sm:$0xff]
      %v1280 = vld [vmem:[%s1271 + $0x60] sm:$0xff]
      %v1281 = vld [vmem:[%s1271 + $0x68] sm:$0xff]
      %v1282 = vld [vmem:[%s1271 + $0x78] sm:$0xff]
      %v1283 = vld [vmem:[%s1271 + $0x80] sm:$0xff]
      %v1284 = vld [vmem:[%s1271 + $0x90] sm:$0xff]
      %v1285 = vld [vmem:[%s1271 + $0x98] sm:$0xff]
      %v1286 = vld [vmem:[%s1271 + $0xa8] sm:$0xff]
      %v1287 = vld [vmem:[%s1271 + $0xb0] sm:$0xff]
      %v1288 = vld [vmem:[%s1271 + $0xc0] sm:$0xff]
      %v1289 = vld [vmem:[%s1271 + $0xc8] sm:$0xff]
      %v1290 = vld [vmem:[%s1271 + $0xd8] sm:$0xff]
      %v1291 = vld [vmem:[%s1271 + $0xe0] sm:$0xff]
      %v1292 = vld [vmem:[%s1271 + $0xf0] sm:$0xff]
      %v1293 = vld [vmem:[%s1271 + $0xf8] sm:$0xff]
      %v1294 = vld [vmem:[%s1271 + $0x108] sm:$0xff]
      %v1295 = vld [vmem:[%s1271 + $0x110] sm:$0xff]
      %v1296 = vld [vmem:[%s1271 + $0x120] sm:$0xff]
      %v1297 = vld [vmem:[%s1271 + $0x128] sm:$0xff]
      %v1298 = vld [vmem:[%s1271 + $0x138] sm:$0xff]
      %v1299 = vld [vmem:[%s1271 + $0x140] sm:$0xff]
      %v1300 = vld [vmem:[%s1271 + $0x150] sm:$0xff]
      %v1301 = vld [vmem:[%s1271 + $0x158] sm:$0xff]
      %v1302 = vld [vmem:[%s1271 + $0x168] sm:$0xff]
      %v1303 = vld [vmem:[%s1271 + $0x170] sm:$0xff]
      %v1304 = vperm.slane %v687, 6
      %v1305 = vmul.f32 %v1272, %v1304
      %v1306 = vmul.f32 %v1273, %v1304
      %v1307 = vmul.f32 %v1274, %v1304
      %v1308 = vmul.f32 %v1275, %v1304
      %v1309 = vmul.f32 %v1276, %v1304
      %v1310 = vmul.f32 %v1277, %v1304
      %v1311 = vmul.f32 %v1278, %v1304
      %v1312 = vmul.f32 %v1279, %v1304
      %v1313 = vmul.f32 %v1280, %v1304
      %v1314 = vmul.f32 %v1281, %v1304
      %v1315 = vmul.f32 %v1282, %v1304
      %v1316 = vmul.f32 %v1283, %v1304
      %v1317 = vmul.f32 %v1284, %v1304
      %v1318 = vmul.f32 %v1285, %v1304
      %v1319 = vmul.f32 %v1286, %v1304
      %v1320 = vmul.f32 %v1287, %v1304
      %v1321 = vmul.f32 %v1288, %v1304
      %v1322 = vmul.f32 %v1289, %v1304
      %v1323 = vmul.f32 %v1290, %v1304
      %v1324 = vmul.f32 %v1291, %v1304
      %v1325 = vmul.f32 %v1292, %v1304
      %v1326 = vmul.f32 %v1293, %v1304
      %v1327 = vmul.f32 %v1294, %v1304
      %v1328 = vmul.f32 %v1295, %v1304
      %v1329 = vmul.f32 %v1296, %v1304
      %v1330 = vmul.f32 %v1297, %v1304
      %v1331 = vmul.f32 %v1298, %v1304
      %v1332 = vmul.f32 %v1299, %v1304
      %v1333 = vmul.f32 %v1300, %v1304
      %v1334 = vmul.f32 %v1301, %v1304
      %v1335 = vmul.f32 %v1302, %v1304
      %v1336 = vmul.f32 %v1303, %v1304
      %v1337 = vadd.f32 %v1239, %v1305
      %v1338 = vadd.f32 %v1240, %v1306
      %v1339 = vadd.f32 %v1241, %v1307
      %v1340 = vadd.f32 %v1242, %v1308
      %v1341 = vadd.f32 %v1243, %v1309
      %v1342 = vadd.f32 %v1244, %v1310
      %v1343 = vadd.f32 %v1245, %v1311
      %v1344 = vadd.f32 %v1246, %v1312
      %v1345 = vadd.f32 %v1247, %v1313
      %v1346 = vadd.f32 %v1248, %v1314
      %v1347 = vadd.f32 %v1249, %v1315
      %v1348 = vadd.f32 %v1250, %v1316
      %v1349 = vadd.f32 %v1251, %v1317
      %v1350 = vadd.f32 %v1252, %v1318
      %v1351 = vadd.f32 %v1253, %v1319
      %v1352 = vadd.f32 %v1254, %v1320
      %v1353 = vadd.f32 %v1255, %v1321
      %v1354 = vadd.f32 %v1256, %v1322
      %v1355 = vadd.f32 %v1257, %v1323
      %v1356 = vadd.f32 %v1258, %v1324
      %v1357 = vadd.f32 %v1259, %v1325
      %v1358 = vadd.f32 %v1260, %v1326
      %v1359 = vadd.f32 %v1261, %v1327
      %v1360 = vadd.f32 %v1262, %v1328
      %v1361 = vadd.f32 %v1263, %v1329
      %v1362 = vadd.f32 %v1264, %v1330
      %v1363 = vadd.f32 %v1265, %v1331
      %v1364 = vadd.f32 %v1266, %v1332
      %v1365 = vadd.f32 %v1267, %v1333
      %v1366 = vadd.f32 %v1268, %v1334
      %v1367 = vadd.f32 %v1269, %v1335
      %v1368 = vadd.f32 %v1270, %v1336
      %v1369 = vld [vmem:[%s1271 + $0x1] sm:$0xff]
      %v1370 = vld [vmem:[%s1271 + $0x9] sm:$0xff]
      %v1371 = vld [vmem:[%s1271 + $0x19] sm:$0xff]
      %v1372 = vld [vmem:[%s1271 + $0x21] sm:$0xff]
      %v1373 = vld [vmem:[%s1271 + $0x31] sm:$0xff]
      %v1374 = vld [vmem:[%s1271 + $0x39] sm:$0xff]
      %v1375 = vld [vmem:[%s1271 + $0x49] sm:$0xff]
      %v1376 = vld [vmem:[%s1271 + $0x51] sm:$0xff]
      %v1377 = vld [vmem:[%s1271 + $0x61] sm:$0xff]
      %v1378 = vld [vmem:[%s1271 + $0x69] sm:$0xff]
      %v1379 = vld [vmem:[%s1271 + $0x79] sm:$0xff]
      %v1380 = vld [vmem:[%s1271 + $0x81] sm:$0xff]
      %v1381 = vld [vmem:[%s1271 + $0x91] sm:$0xff]
      %v1382 = vld [vmem:[%s1271 + $0x99] sm:$0xff]
      %v1383 = vld [vmem:[%s1271 + $0xa9] sm:$0xff]
      %v1384 = vld [vmem:[%s1271 + $0xb1] sm:$0xff]
      %v1385 = vld [vmem:[%s1271 + $0xc1] sm:$0xff]
      %v1386 = vld [vmem:[%s1271 + $0xc9] sm:$0xff]
      %v1387 = vld [vmem:[%s1271 + $0xd9] sm:$0xff]
      %v1388 = vld [vmem:[%s1271 + $0xe1] sm:$0xff]
      %v1389 = vld [vmem:[%s1271 + $0xf1] sm:$0xff]
      %v1390 = vld [vmem:[%s1271 + $0xf9] sm:$0xff]
      %v1391 = vld [vmem:[%s1271 + $0x109] sm:$0xff]
      %v1392 = vld [vmem:[%s1271 + $0x111] sm:$0xff]
      %v1393 = vld [vmem:[%s1271 + $0x121] sm:$0xff]
      %v1394 = vld [vmem:[%s1271 + $0x129] sm:$0xff]
      %v1395 = vld [vmem:[%s1271 + $0x139] sm:$0xff]
      %v1396 = vld [vmem:[%s1271 + $0x141] sm:$0xff]
      %v1397 = vld [vmem:[%s1271 + $0x151] sm:$0xff]
      %v1398 = vld [vmem:[%s1271 + $0x159] sm:$0xff]
      %v1399 = vld [vmem:[%s1271 + $0x169] sm:$0xff]
      %v1400 = vld [vmem:[%s1271 + $0x171] sm:$0xff]
      %v1401 = vperm.slane %v687, 7
      %v1402 = vmul.f32 %v1369, %v1401
      %v1403 = vmul.f32 %v1370, %v1401
      %v1404 = vmul.f32 %v1371, %v1401
      %v1405 = vmul.f32 %v1372, %v1401
      %v1406 = vmul.f32 %v1373, %v1401
      %v1407 = vmul.f32 %v1374, %v1401
      %v1408 = vmul.f32 %v1375, %v1401
      %v1409 = vmul.f32 %v1376, %v1401
      %v1410 = vmul.f32 %v1377, %v1401
      %v1411 = vmul.f32 %v1378, %v1401
      %v1412 = vmul.f32 %v1379, %v1401
      %v1413 = vmul.f32 %v1380, %v1401
      %v1414 = vmul.f32 %v1381, %v1401
      %v1415 = vmul.f32 %v1382, %v1401
      %v1416 = vmul.f32 %v1383, %v1401
      %v1417 = vmul.f32 %v1384, %v1401
      %v1418 = vmul.f32 %v1385, %v1401
      %v1419 = vmul.f32 %v1386, %v1401
      %v1420 = vmul.f32 %v1387, %v1401
      %v1421 = vmul.f32 %v1388, %v1401
      %v1422 = vmul.f32 %v1389, %v1401
      %v1423 = vmul.f32 %v1390, %v1401
      %v1424 = vmul.f32 %v1391, %v1401
      %v1425 = vmul.f32 %v1392, %v1401
      %v1426 = vmul.f32 %v1393, %v1401
      %v1427 = vmul.f32 %v1394, %v1401
      %v1428 = vmul.f32 %v1395, %v1401
      %v1429 = vmul.f32 %v1396, %v1401
      %v1430 = vmul.f32 %v1397, %v1401
      %v1431 = vmul.f32 %v1398, %v1401
      %v1432 = vmul.f32 %v1399, %v1401
      %v1433 = vmul.f32 %v1400, %v1401
      %v1434 = vadd.f32 %v1337, %v1402
      %v1435 = vadd.f32 %v1338, %v1403
      %v1436 = vadd.f32 %v1339, %v1404
      %v1437 = vadd.f32 %v1340, %v1405
      %v1438 = vadd.f32 %v1341, %v1406
      %v1439 = vadd.f32 %v1342, %v1407
      %v1440 = vadd.f32 %v1343, %v1408
      %v1441 = vadd.f32 %v1344, %v1409
      %v1442 = vadd.f32 %v1345, %v1410
      %v1443 = vadd.f32 %v1346, %v1411
      %v1444 = vadd.f32 %v1347, %v1412
      %v1445 = vadd.f32 %v1348, %v1413
      %v1446 = vadd.f32 %v1349, %v1414
      %v1447 = vadd.f32 %v1350, %v1415
      %v1448 = vadd.f32 %v1351, %v1416
      %v1449 = vadd.f32 %v1352, %v1417
      %v1450 = vadd.f32 %v1353, %v1418
      %v1451 = vadd.f32 %v1354, %v1419
      %v1452 = vadd.f32 %v1355, %v1420
      %v1453 = vadd.f32 %v1356, %v1421
      %v1454 = vadd.f32 %v1357, %v1422
      %v1455 = vadd.f32 %v1358, %v1423
      %v1456 = vadd.f32 %v1359, %v1424
      %v1457 = vadd.f32 %v1360, %v1425
      %v1458 = vadd.f32 %v1361, %v1426
      %v1459 = vadd.f32 %v1362, %v1427
      %v1460 = vadd.f32 %v1363, %v1428
      %v1461 = vadd.f32 %v1364, %v1429
      %v1462 = vadd.f32 %v1365, %v1430
      %v1463 = vadd.f32 %v1366, %v1431
      %v1464 = vadd.f32 %v1367, %v1432
      %v1465 = vadd.f32 %v1368, %v1433
      %v1466 = vld [vmem:[%s1271 + $0x2] sm:$0xff]
      %v1467 = vld [vmem:[%s1271 + $0xa] sm:$0xff]
      %v1468 = vld [vmem:[%s1271 + $0x1a] sm:$0xff]
      %v1469 = vld [vmem:[%s1271 + $0x22] sm:$0xff]
      %v1470 = vld [vmem:[%s1271 + $0x32] sm:$0xff]
      %v1471 = vld [vmem:[%s1271 + $0x3a] sm:$0xff]
      %v1472 = vld [vmem:[%s1271 + $0x4a] sm:$0xff]
      %v1473 = vld [vmem:[%s1271 + $0x52] sm:$0xff]
      %v1474 = vld [vmem:[%s1271 + $0x62] sm:$0xff]
      %v1475 = vld [vmem:[%s1271 + $0x6a] sm:$0xff]
      %v1476 = vld [vmem:[%s1271 + $0x7a] sm:$0xff]
      %v1477 = vld [vmem:[%s1271 + $0x82] sm:$0xff]
      %v1478 = vld [vmem:[%s1271 + $0x92] sm:$0xff]
      %v1479 = vld [vmem:[%s1271 + $0x9a] sm:$0xff]
      %v1480 = vld [vmem:[%s1271 + $0xaa] sm:$0xff]
      %v1481 = vld [vmem:[%s1271 + $0xb2] sm:$0xff]
      %v1482 = vld [vmem:[%s1271 + $0xc2] sm:$0xff]
      %v1483 = vld [vmem:[%s1271 + $0xca] sm:$0xff]
      %v1484 = vld [vmem:[%s1271 + $0xda] sm:$0xff]
      %v1485 = vld [vmem:[%s1271 + $0xe2] sm:$0xff]
      %v1486 = vld [vmem:[%s1271 + $0xf2] sm:$0xff]
      %v1487 = vld [vmem:[%s1271 + $0xfa] sm:$0xff]
      %v1488 = vld [vmem:[%s1271 + $0x10a] sm:$0xff]
      %v1489 = vld [vmem:[%s1271 + $0x112] sm:$0xff]
      %v1490 = vld [vmem:[%s1271 + $0x122] sm:$0xff]
      %v1491 = vld [vmem:[%s1271 + $0x12a] sm:$0xff]
      %v1492 = vld [vmem:[%s1271 + $0x13a] sm:$0xff]
      %v1493 = vld [vmem:[%s1271 + $0x142] sm:$0xff]
      %v1494 = vld [vmem:[%s1271 + $0x152] sm:$0xff]
      %v1495 = vld [vmem:[%s1271 + $0x15a] sm:$0xff]
      %v1496 = vld [vmem:[%s1271 + $0x16a] sm:$0xff]
      %v1497 = vld [vmem:[%s1271 + $0x172] sm:$0xff]
      %v1498 = vperm.slane %v688, 0
      %v1499 = vmul.f32 %v1466, %v1498
      %v1500 = vmul.f32 %v1467, %v1498
      %v1501 = vmul.f32 %v1468, %v1498
      %v1502 = vmul.f32 %v1469, %v1498
      %v1503 = vmul.f32 %v1470, %v1498
      %v1504 = vmul.f32 %v1471, %v1498
      %v1505 = vmul.f32 %v1472, %v1498
      %v1506 = vmul.f32 %v1473, %v1498
      %v1507 = vmul.f32 %v1474, %v1498
      %v1508 = vmul.f32 %v1475, %v1498
      %v1509 = vmul.f32 %v1476, %v1498
      %v1510 = vmul.f32 %v1477, %v1498
      %v1511 = vmul.f32 %v1478, %v1498
      %v1512 = vmul.f32 %v1479, %v1498
      %v1513 = vmul.f32 %v1480, %v1498
      %v1514 = vmul.f32 %v1481, %v1498
      %v1515 = vmul.f32 %v1482, %v1498
      %v1516 = vmul.f32 %v1483, %v1498
      %v1517 = vmul.f32 %v1484, %v1498
      %v1518 = vmul.f32 %v1485, %v1498
      %v1519 = vmul.f32 %v1486, %v1498
      %v1520 = vmul.f32 %v1487, %v1498
      %v1521 = vmul.f32 %v1488, %v1498
      %v1522 = vmul.f32 %v1489, %v1498
      %v1523 = vmul.f32 %v1490, %v1498
      %v1524 = vmul.f32 %v1491, %v1498
      %v1525 = vmul.f32 %v1492, %v1498
      %v1526 = vmul.f32 %v1493, %v1498
      %v1527 = vmul.f32 %v1494, %v1498
      %v1528 = vmul.f32 %v1495, %v1498
      %v1529 = vmul.f32 %v1496, %v1498
      %v1530 = vmul.f32 %v1497, %v1498
      %v1531 = vadd.f32 %v1434, %v1499
      %v1532 = vadd.f32 %v1435, %v1500
      %v1533 = vadd.f32 %v1436, %v1501
      %v1534 = vadd.f32 %v1437, %v1502
      %v1535 = vadd.f32 %v1438, %v1503
      %v1536 = vadd.f32 %v1439, %v1504
      %v1537 = vadd.f32 %v1440, %v1505
      %v1538 = vadd.f32 %v1441, %v1506
      %v1539 = vadd.f32 %v1442, %v1507
      %v1540 = vadd.f32 %v1443, %v1508
      %v1541 = vadd.f32 %v1444, %v1509
      %v1542 = vadd.f32 %v1445, %v1510
      %v1543 = vadd.f32 %v1446, %v1511
      %v1544 = vadd.f32 %v1447, %v1512
      %v1545 = vadd.f32 %v1448, %v1513
      %v1546 = vadd.f32 %v1449, %v1514
      %v1547 = vadd.f32 %v1450, %v1515
      %v1548 = vadd.f32 %v1451, %v1516
      %v1549 = vadd.f32 %v1452, %v1517
      %v1550 = vadd.f32 %v1453, %v1518
      %v1551 = vadd.f32 %v1454, %v1519
      %v1552 = vadd.f32 %v1455, %v1520
      %v1553 = vadd.f32 %v1456, %v1521
      %v1554 = vadd.f32 %v1457, %v1522
      %v1555 = vadd.f32 %v1458, %v1523
      %v1556 = vadd.f32 %v1459, %v1524
      %v1557 = vadd.f32 %v1460, %v1525
      %v1558 = vadd.f32 %v1461, %v1526
      %v1559 = vadd.f32 %v1462, %v1527
      %v1560 = vadd.f32 %v1463, %v1528
      %v1561 = vadd.f32 %v1464, %v1529
      %v1562 = vadd.f32 %v1465, %v1530
      %v1563 = vld [vmem:[%s4] sm:$0x1]
      %v1565 = vperm.slane %v1563, 0
      %v1567 = vadd.f32 %v1531, %v1565
      %v1568 = vadd.f32 %v1532, %v1565
      %v1569 = vadd.f32 %v1533, %v1565
      %v1570 = vadd.f32 %v1534, %v1565
      %v1571 = vadd.f32 %v1535, %v1565
      %v1572 = vadd.f32 %v1536, %v1565
      %v1573 = vadd.f32 %v1537, %v1565
      %v1574 = vadd.f32 %v1538, %v1565
      %v1575 = vadd.f32 %v1539, %v1565
      %v1576 = vadd.f32 %v1540, %v1565
      %v1577 = vadd.f32 %v1541, %v1565
      %v1578 = vadd.f32 %v1542, %v1565
      %v1579 = vadd.f32 %v1543, %v1565
      %v1580 = vadd.f32 %v1544, %v1565
      %v1581 = vadd.f32 %v1545, %v1565
      %v1582 = vadd.f32 %v1546, %v1565
      %v1583 = vadd.f32 %v1547, %v1565
      %v1584 = vadd.f32 %v1548, %v1565
      %v1585 = vadd.f32 %v1549, %v1565
      %v1586 = vadd.f32 %v1550, %v1565
      %v1587 = vadd.f32 %v1551, %v1565
      %v1588 = vadd.f32 %v1552, %v1565
      %v1589 = vadd.f32 %v1553, %v1565
      %v1590 = vadd.f32 %v1554, %v1565
      %v1591 = vadd.f32 %v1555, %v1565
      %v1592 = vadd.f32 %v1556, %v1565
      %v1593 = vadd.f32 %v1557, %v1565
      %v1594 = vadd.f32 %v1558, %v1565
      %v1595 = vadd.f32 %v1559, %v1565
      %v1596 = vadd.f32 %v1560, %v1565
      %v1597 = vadd.f32 %v1561, %v1565
      %v1598 = vadd.f32 %v1562, %v1565
      %v1599 = vsel %vm612, %v1567, 0.0
      %v1600 = vsel %vm612, %v1568, 0.0
      %v1601 = vadd.f32 %v1599, %v1600
      %v1602 = vsel %vm612, %v1569, 0.0
      %v1603 = vadd.f32 %v1601, %v1602
      %v1604 = vsel %vm612, %v1570, 0.0
      %v1605 = vadd.f32 %v1603, %v1604
      %v1606 = vsel %vm612, %v1571, 0.0
      %v1607 = vadd.f32 %v1605, %v1606
      %v1608 = vsel %vm612, %v1572, 0.0
      %v1609 = vadd.f32 %v1607, %v1608
      %v1610 = vsel %vm612, %v1573, 0.0
      %v1611 = vadd.f32 %v1609, %v1610
      %v1612 = vsel %vm612, %v1574, 0.0
      %v1613 = vadd.f32 %v1611, %v1612
      %v1614 = vsel %vm612, %v1575, 0.0
      %v1615 = vadd.f32 %v1613, %v1614
      %v1616 = vsel %vm612, %v1576, 0.0
      %v1617 = vadd.f32 %v1615, %v1616
      %v1618 = vsel %vm612, %v1577, 0.0
      %v1619 = vadd.f32 %v1617, %v1618
      %v1620 = vsel %vm612, %v1578, 0.0
      %v1621 = vadd.f32 %v1619, %v1620
      %v1622 = vsel %vm612, %v1579, 0.0
      %v1623 = vadd.f32 %v1621, %v1622
      %v1624 = vsel %vm612, %v1580, 0.0
      %v1625 = vadd.f32 %v1623, %v1624
      %v1626 = vsel %vm612, %v1581, 0.0
      %v1627 = vadd.f32 %v1625, %v1626
      %v1628 = vsel %vm612, %v1582, 0.0
      %v1629 = vadd.f32 %v1627, %v1628
      %v1630 = vsel %vm612, %v1583, 0.0
      %v1631 = vadd.f32 %v1629, %v1630
      %v1632 = vsel %vm612, %v1584, 0.0
      %v1633 = vadd.f32 %v1631, %v1632
      %v1634 = vsel %vm612, %v1585, 0.0
      %v1635 = vadd.f32 %v1633, %v1634
      %v1636 = vsel %vm612, %v1586, 0.0
      %v1637 = vadd.f32 %v1635, %v1636
      %v1638 = vsel %vm612, %v1587, 0.0
      %v1639 = vadd.f32 %v1637, %v1638
      %v1640 = vsel %vm612, %v1588, 0.0
      %v1641 = vadd.f32 %v1639, %v1640
      %v1642 = vsel %vm612, %v1589, 0.0
      %v1643 = vadd.f32 %v1641, %v1642
      %v1644 = vsel %vm612, %v1590, 0.0
      %v1645 = vadd.f32 %v1643, %v1644
      %v1646 = vsel %vm612, %v1591, 0.0
      %v1647 = vadd.f32 %v1645, %v1646
      %v1648 = vsel %vm612, %v1592, 0.0
      %v1649 = vadd.f32 %v1647, %v1648
      %v1650 = vsel %vm612, %v1593, 0.0
      %v1651 = vadd.f32 %v1649, %v1650
      %v1652 = vsel %vm612, %v1594, 0.0
      %v1653 = vadd.f32 %v1651, %v1652
      %v1654 = vsel %vm612, %v1595, 0.0
      %v1655 = vadd.f32 %v1653, %v1654
      %v1656 = vsel %vm612, %v1596, 0.0
      %v1657 = vadd.f32 %v1655, %v1656
      %v1658 = vsel %vm612, %v1597, 0.0
      %v1659 = vadd.f32 %v1657, %v1658
      %v1660 = vsel %vm612, %v1598, 0.0
      %v1661 = vadd.f32 %v1659, %v1660
      %v1662 = vrot.slane %v1661, 4
      %v1663 = vadd.f32 %v1661, %v1662
      %v1664 = vrot.slane %v1663, 2
      %v1665 = vadd.f32 %v1663, %v1664
      %v1666 = vrot.slane %v1665, 1
      %v1667 = vadd.f32 %v1665, %v1666
      %v1668 = vld [vmem:[%s5] sm:$0xff]
      %v1669 = vld [vmem:[%s5 + $0x8] sm:$0xff]
      %v1671 = vsel %vm612, %v1667, 0
      %1673 = vmatpush.msra.mxu0 0.0
      %1674 = vmatpush.msra.mxu0 0.0
      %1675 = vmatpush.msra.mxu0 0.0
      %1676 = vmatpush.msra.mxu0 0.0
      %1677 = vmatpush.msra.mxu0 0.0
      %1678 = vmatpush.msra.mxu0 0.0
      %1679 = vmatpush.msra.mxu0 0.0
      %1680 = vmatpush.msra.mxu0 0.0
      %1681 = vmatpush.msra.mxu0 0.0
      %1682 = vmatpush.msra.mxu0 0.0
      %1683 = vmatpush.msra.mxu0 0.0
      %1684 = vmatpush.msra.mxu0 0.0
      %1685 = vmatpush.msra.mxu0 0.0
      %1686 = vmatpush.msra.mxu0 0.0
      %1687 = vmatpush.msra.mxu0 %v1669
      %1688 = vmatpush.msra.mxu0 %v1668
      %1689 = vmatmul.f32.gmra.mxu0 %v1671
      %v1690 = vpop.f32.mrf.mxu0
      %v1691 = vadd.f32 0.0, %v1690
      %1692 = vdwg.mxu0
      %v1693 = vmax.f32 %v1691, 0.0
      %v1694 = vld [vmem:[%s6] sm:$0xf]
      %vm1695 = vcmask 31744
      %v1697 = vsel %vm1695, %v1693, 0
      %vm1699 = vcmask 1043456
      %v1701 = vsel %vm1699, %v1694, 0
      %1703 = vmatpush.msra.mxu0 0.0
      %1704 = vmatpush.msra.mxu0 0.0
      %1705 = vmatpush.msra.mxu0 0.0
      %1706 = vmatpush.msra.mxu0 0.0
      %1707 = vmatpush.msra.mxu0 0.0
      %1708 = vmatpush.msra.mxu0 0.0
      %1709 = vmatpush.msra.mxu0 0.0
      %1710 = vmatpush.msra.mxu0 0.0
      %1711 = vmatpush.msra.mxu0 0.0
      %1712 = vmatpush.msra.mxu0 0.0
      %1713 = vmatpush.msra.mxu0 0.0
      %1714 = vmatpush.msra.mxu0 0.0
      %1715 = vmatpush.msra.mxu0 0.0
      %1716 = vmatpush.msra.mxu0 0.0
      %1717 = vmatpush.msra.mxu0 0.0
      %1718 = vmatpush.msra.mxu0 %v1701
      %1719 = vmatmul.f32.gmra.mxu0 %v1697
      %v1720 = vpop.f32.mrf.mxu0
      %v1721 = vadd.f32 3.0, %v1720
      %1722 = vdwg.mxu0
      %v1723 = vmax.f32 %v1721, 0.0
      %v1724 = vmin.f32 %v1723, 6.0
      %v1725 = vmul.f32 %v1724, 0.16666667
      %v1726 = vperm.slane %v1725, 0
      %v1727 = vmul.f32 %v1567, %v1726
      %v1728 = vmul.f32 %v1568, %v1726
      %v1729 = vmul.f32 %v1569, %v1726
      %v1730 = vmul.f32 %v1570, %v1726
      %v1731 = vmul.f32 %v1571, %v1726
      %v1732 = vmul.f32 %v1572, %v1726
      %v1733 = vmul.f32 %v1573, %v1726
      %v1734 = vmul.f32 %v1574, %v1726
      %v1735 = vmul.f32 %v1575, %v1726
      %v1736 = vmul.f32 %v1576, %v1726
      %v1737 = vmul.f32 %v1577, %v1726
      %v1738 = vmul.f32 %v1578, %v1726
      %v1739 = vmul.f32 %v1579, %v1726
      %v1740 = vmul.f32 %v1580, %v1726
      %v1741 = vmul.f32 %v1581, %v1726
      %v1742 = vmul.f32 %v1582, %v1726
      %v1743 = vmul.f32 %v1583, %v1726
      %v1744 = vmul.f32 %v1584, %v1726
      %v1745 = vmul.f32 %v1585, %v1726
      %v1746 = vmul.f32 %v1586, %v1726
      %v1747 = vmul.f32 %v1587, %v1726
      %v1748 = vmul.f32 %v1588, %v1726
      %v1749 = vmul.f32 %v1589, %v1726
      %v1750 = vmul.f32 %v1590, %v1726
      %v1751 = vmul.f32 %v1591, %v1726
      %v1752 = vmul.f32 %v1592, %v1726
      %v1753 = vmul.f32 %v1593, %v1726
      %v1754 = vmul.f32 %v1594, %v1726
      %v1755 = vmul.f32 %v1595, %v1726
      %v1756 = vmul.f32 %v1596, %v1726
      %v1757 = vmul.f32 %v1597, %v1726
      %v1758 = vmul.f32 %v1598, %v1726
      %v1759 = vmax.f32 %v1727, 0.0
      %v1760 = vmax.f32 %v1728, 0.0
      %v1761 = vmax.f32 %v1729, 0.0
      %v1762 = vmax.f32 %v1730, 0.0
      %v1763 = vmax.f32 %v1731, 0.0
      %v1764 = vmax.f32 %v1732, 0.0
      %v1765 = vmax.f32 %v1733, 0.0
      %v1766 = vmax.f32 %v1734, 0.0
      %v1767 = vmax.f32 %v1735, 0.0
      %v1768 = vmax.f32 %v1736, 0.0
      %v1769 = vmax.f32 %v1737, 0.0
      %v1770 = vmax.f32 %v1738, 0.0
      %v1771 = vmax.f32 %v1739, 0.0
      %v1772 = vmax.f32 %v1740, 0.0
      %v1773 = vmax.f32 %v1741, 0.0
      %v1774 = vmax.f32 %v1742, 0.0
      %v1775 = vmax.f32 %v1743, 0.0
      %v1776 = vmax.f32 %v1744, 0.0
      %v1777 = vmax.f32 %v1745, 0.0
      %v1778 = vmax.f32 %v1746, 0.0
      %v1779 = vmax.f32 %v1747, 0.0
      %v1780 = vmax.f32 %v1748, 0.0
      %v1781 = vmax.f32 %v1749, 0.0
      %v1782 = vmax.f32 %v1750, 0.0
      %v1783 = vmax.f32 %v1751, 0.0
      %v1784 = vmax.f32 %v1752, 0.0
      %v1785 = vmax.f32 %v1753, 0.0
      %v1786 = vmax.f32 %v1754, 0.0
      %v1787 = vmax.f32 %v1755, 0.0
      %v1788 = vmax.f32 %v1756, 0.0
      %v1789 = vmax.f32 %v1757, 0.0
      %v1790 = vmax.f32 %v1758, 0.0
      %v1791 = vld [vmem:[%s7] sm:$0xff]
      %v1792 = vld [vmem:[%s7 + $0x8] sm:$0xff]
      %v1793 = vld [vmem:[%s8] sm:$0x1]
      %v1795 = vperm.slane %v1793, 0
      %v1798 = vsel %vm612, %v1759, 0
      %v1801 = vsel %vm612, %v1760, 0
      %v1804 = vsel %vm612, %v1761, 0
      %v1807 = vsel %vm612, %v1762, 0
      %v1810 = vsel %vm612, %v1763, 0
      %v1813 = vsel %vm612, %v1764, 0
      %v1816 = vsel %vm612, %v1765, 0
      %v1819 = vsel %vm612, %v1766, 0
      %v1822 = vsel %vm612, %v1767, 0
      %v1825 = vsel %vm612, %v1768, 0
      %v1828 = vsel %vm612, %v1769, 0
      %v1831 = vsel %vm612, %v1770, 0
      %v1834 = vsel %vm612, %v1771, 0
      %v1837 = vsel %vm612, %v1772, 0
      %v1840 = vsel %vm612, %v1773, 0
      %v1843 = vsel %vm612, %v1774, 0
      %v1846 = vsel %vm612, %v1775, 0
      %v1849 = vsel %vm612, %v1776, 0
      %v1852 = vsel %vm612, %v1777, 0
      %v1855 = vsel %vm612, %v1778, 0
      %v1858 = vsel %vm612, %v1779, 0
      %v1861 = vsel %vm612, %v1780, 0
      %v1864 = vsel %vm612, %v1781, 0
      %v1867 = vsel %vm612, %v1782, 0
      %v1870 = vsel %vm612, %v1783, 0
      %v1873 = vsel %vm612, %v1784, 0
      %v1876 = vsel %vm612, %v1785, 0
      %v1879 = vsel %vm612, %v1786, 0
      %v1882 = vsel %vm612, %v1787, 0
      %v1885 = vsel %vm612, %v1788, 0
      %v1888 = vsel %vm612, %v1789, 0
      %v1891 = vsel %vm612, %v1790, 0
      %1893 = vmatpush.msra.mxu0 0.0
      %1894 = vmatpush.msra.mxu0 0.0
      %1895 = vmatpush.msra.mxu0 0.0
      %1896 = vmatpush.msra.mxu0 0.0
      %1897 = vmatpush.msra.mxu0 0.0
      %1898 = vmatpush.msra.mxu0 0.0
      %1899 = vmatpush.msra.mxu0 0.0
      %1900 = vmatpush.msra.mxu0 0.0
      %1901 = vmatpush.msra.mxu0 0.0
      %1902 = vmatpush.msra.mxu0 0.0
      %1903 = vmatpush.msra.mxu0 0.0
      %1904 = vmatpush.msra.mxu0 0.0
      %1905 = vmatpush.msra.mxu0 0.0
      %1906 = vmatpush.msra.mxu0 0.0
      %1907 = vmatpush.msra.mxu0 %v1792
      %1908 = vmatpush.msra.mxu0 %v1791
      %1909 = vmatmul.f32.gmra.mxu0 %v1798
      %v1910 = vpop.f32.mrf.mxu0
      %v1911 = vadd.f32 %v1795, %v1910
      %1912 = vmatmul.f32.gmra.mxu0 %v1801
      %v1913 = vpop.f32.mrf.mxu0
      %v1914 = vadd.f32 %v1795, %v1913
      %1915 = vmatmul.f32.gmra.mxu0 %v1804
      %v1916 = vpop.f32.mrf.mxu0
      %v1917 = vadd.f32 %v1795, %v1916
      %1918 = vmatmul.f32.gmra.mxu0 %v1807
      %v1919 = vpop.f32.mrf.mxu0
      %v1920 = vadd.f32 %v1795, %v1919
      %1921 = vmatmul.f32.gmra.mxu0 %v1810
      %v1922 = vpop.f32.mrf.mxu0
      %v1923 = vadd.f32 %v1795, %v1922
      %1924 = vmatmul.f32.gmra.mxu0 %v1813
      %v1925 = vpop.f32.mrf.mxu0
      %v1926 = vadd.f32 %v1795, %v1925
      %1927 = vmatmul.f32.gmra.mxu0 %v1816
      %v1928 = vpop.f32.mrf.mxu0
      %v1929 = vadd.f32 %v1795, %v1928
      %1930 = vmatmul.f32.gmra.mxu0 %v1819
      %v1931 = vpop.f32.mrf.mxu0
      %v1932 = vadd.f32 %v1795, %v1931
      %1933 = vmatmul.f32.gmra.mxu0 %v1822
      %v1934 = vpop.f32.mrf.mxu0
      %v1935 = vadd.f32 %v1795, %v1934
      %1936 = vmatmul.f32.gmra.mxu0 %v1825
      %v1937 = vpop.f32.mrf.mxu0
      %v1938 = vadd.f32 %v1795, %v1937
      %1939 = vmatmul.f32.gmra.mxu0 %v1828
      %v1940 = vpop.f32.mrf.mxu0
      %v1941 = vadd.f32 %v1795, %v1940
      %1942 = vmatmul.f32.gmra.mxu0 %v1831
      %v1943 = vpop.f32.mrf.mxu0
      %v1944 = vadd.f32 %v1795, %v1943
      %1945 = vmatmul.f32.gmra.mxu0 %v1834
      %v1946 = vpop.f32.mrf.mxu0
      %v1947 = vadd.f32 %v1795, %v1946
      %1948 = vmatmul.f32.gmra.mxu0 %v1837
      %v1949 = vpop.f32.mrf.mxu0
      %v1950 = vadd.f32 %v1795, %v1949
      %1951 = vmatmul.f32.gmra.mxu0 %v1840
      %v1952 = vpop.f32.mrf.mxu0
      %v1953 = vadd.f32 %v1795, %v1952
      %1954 = vmatmul.f32.gmra.mxu0 %v1843
      %v1955 = vpop.f32.mrf.mxu0
      %v1956 = vadd.f32 %v1795, %v1955
      %1957 = vmatmul.f32.gmra.mxu0 %v1846
      %v1958 = vpop.f32.mrf.mxu0
      %v1959 = vadd.f32 %v1795, %v1958
      %1960 = vmatmul.f32.gmra.mxu0 %v1849
      %v1961 = vpop.f32.mrf.mxu0
      %v1962 = vadd.f32 %v1795, %v1961
      %1963 = vmatmul.f32.gmra.mxu0 %v1852
      %v1964 = vpop.f32.mrf.mxu0
      %v1965 = vadd.f32 %v1795, %v1964
      %1966 = vmatmul.f32.gmra.mxu0 %v1855
      %v1967 = vpop.f32.mrf.mxu0
      %v1968 = vadd.f32 %v1795, %v1967
      %1969 = vmatmul.f32.gmra.mxu0 %v1858
      %v1970 = vpop.f32.mrf.mxu0
      %v1971 = vadd.f32 %v1795, %v1970
      %1972 = vmatmul.f32.gmra.mxu0 %v1861
      %v1973 = vpop.f32.mrf.mxu0
      %v1974 = vadd.f32 %v1795, %v1973
      %1975 = vmatmul.f32.gmra.mxu0 %v1864
      %v1976 = vpop.f32.mrf.mxu0
      %v1977 = vadd.f32 %v1795, %v1976
      %1978 = vmatmul.f32.gmra.mxu0 %v1867
      %v1979 = vpop.f32.mrf.mxu0
      %v1980 = vadd.f32 %v1795, %v1979
      %1981 = vmatmul.f32.gmra.mxu0 %v1870
      %v1982 = vpop.f32.mrf.mxu0
      %v1983 = vadd.f32 %v1795, %v1982
      %1984 = vmatmul.f32.gmra.mxu0 %v1873
      %v1985 = vpop.f32.mrf.mxu0
      %v1986 = vadd.f32 %v1795, %v1985
      %1987 = vmatmul.f32.gmra.mxu0 %v1876
      %v1988 = vpop.f32.mrf.mxu0
      %v1989 = vadd.f32 %v1795, %v1988
      %1990 = vmatmul.f32.gmra.mxu0 %v1879
      %v1991 = vpop.f32.mrf.mxu0
      %v1992 = vadd.f32 %v1795, %v1991
      %1993 = vmatmul.f32.gmra.mxu0 %v1882
      %v1994 = vpop.f32.mrf.mxu0
      %v1995 = vadd.f32 %v1795, %v1994
      %1996 = vmatmul.f32.gmra.mxu0 %v1885
      %v1997 = vpop.f32.mrf.mxu0
      %v1998 = vadd.f32 %v1795, %v1997
      %1999 = vmatmul.f32.gmra.mxu0 %v1888
      %v2000 = vpop.f32.mrf.mxu0
      %v2001 = vadd.f32 %v1795, %v2000
      %2002 = vmatmul.f32.gmra.mxu0 %v1891
      %v2003 = vpop.f32.mrf.mxu0
      %v2004 = vadd.f32 %v1795, %v2003
      %2005 = vdwg.mxu0
      %v2006 = vadd.f32 %v1911, %v333
      %v2007 = vadd.f32 %v1914, %v334
      %v2008 = vadd.f32 %v1917, %v335
      %v2009 = vadd.f32 %v1920, %v336
      %v2010 = vadd.f32 %v1923, %v337
      %v2011 = vadd.f32 %v1926, %v338
      %v2012 = vadd.f32 %v1929, %v339
      %v2013 = vadd.f32 %v1932, %v340
      %v2014 = vadd.f32 %v1935, %v341
      %v2015 = vadd.f32 %v1938, %v342
      %v2016 = vadd.f32 %v1941, %v343
      %v2017 = vadd.f32 %v1944, %v344
      %v2018 = vadd.f32 %v1947, %v345
      %v2019 = vadd.f32 %v1950, %v346
      %v2020 = vadd.f32 %v1953, %v347
      %v2021 = vadd.f32 %v1956, %v348
      %v2022 = vadd.f32 %v1959, %v349
      %v2023 = vadd.f32 %v1962, %v350
      %v2024 = vadd.f32 %v1965, %v351
      %v2025 = vadd.f32 %v1968, %v352
      %v2026 = vadd.f32 %v1971, %v353
      %v2027 = vadd.f32 %v1974, %v354
      %v2028 = vadd.f32 %v1977, %v355
      %v2029 = vadd.f32 %v1980, %v356
      %v2030 = vadd.f32 %v1983, %v357
      %v2031 = vadd.f32 %v1986, %v358
      %v2032 = vadd.f32 %v1989, %v359
      %v2033 = vadd.f32 %v1992, %v360
      %v2034 = vadd.f32 %v1995, %v361
      %v2035 = vadd.f32 %v1998, %v362
      %v2036 = vadd.f32 %v2001, %v363
      %v2037 = vadd.f32 %v2004, %v364
      %2038 = vst.msk [vmem:[%s332] sm:$0xff] %vm370, %v2006
      %2039 = vst.msk [vmem:[%s332 + $0x8] sm:$0xff] %vm370, %v2007
      %2040 = vst.msk [vmem:[%s332 + $0x10] sm:$0xff] %vm370, %v2008
      %2041 = vst.msk [vmem:[%s332 + $0x18] sm:$0xff] %vm370, %v2009
      %2042 = vst.msk [vmem:[%s332 + $0x20] sm:$0xff] %vm370, %v2010
      %2043 = vst.msk [vmem:[%s332 + $0x28] sm:$0xff] %vm370, %v2011
      %2044 = vst.msk [vmem:[%s332 + $0x30] sm:$0xff] %vm370, %v2012
      %2045 = vst.msk [vmem:[%s332 + $0x38] sm:$0xff] %vm370, %v2013
      %2046 = vst.msk [vmem:[%s332 + $0x40] sm:$0xff] %vm370, %v2014
      %2047 = vst.msk [vmem:[%s332 + $0x48] sm:$0xff] %vm370, %v2015
      %2048 = vst.msk [vmem:[%s332 + $0x50] sm:$0xff] %vm370, %v2016
      %2049 = vst.msk [vmem:[%s332 + $0x58] sm:$0xff] %vm370, %v2017
      %2050 = vst.msk [vmem:[%s332 + $0x60] sm:$0xff] %vm370, %v2018
      %2051 = vst.msk [vmem:[%s332 + $0x68] sm:$0xff] %vm370, %v2019
      %2052 = vst.msk [vmem:[%s332 + $0x70] sm:$0xff] %vm370, %v2020
      %2053 = vst.msk [vmem:[%s332 + $0x78] sm:$0xff] %vm370, %v2021
      %2054 = vst.msk [vmem:[%s332 + $0x80] sm:$0xff] %vm370, %v2022
      %2055 = vst.msk [vmem:[%s332 + $0x88] sm:$0xff] %vm370, %v2023
      %2056 = vst.msk [vmem:[%s332 + $0x90] sm:$0xff] %vm370, %v2024
      %2057 = vst.msk [vmem:[%s332 + $0x98] sm:$0xff] %vm370, %v2025
      %2058 = vst.msk [vmem:[%s332 + $0xa0] sm:$0xff] %vm370, %v2026
      %2059 = vst.msk [vmem:[%s332 + $0xa8] sm:$0xff] %vm370, %v2027
      %2060 = vst.msk [vmem:[%s332 + $0xb0] sm:$0xff] %vm370, %v2028
      %2061 = vst.msk [vmem:[%s332 + $0xb8] sm:$0xff] %vm370, %v2029
      %2062 = vst.msk [vmem:[%s332 + $0xc0] sm:$0xff] %vm370, %v2030
      %2063 = vst.msk [vmem:[%s332 + $0xc8] sm:$0xff] %vm370, %v2031
      %2064 = vst.msk [vmem:[%s332 + $0xd0] sm:$0xff] %vm370, %v2032
      %2065 = vst.msk [vmem:[%s332 + $0xd8] sm:$0xff] %vm370, %v2033
      %2066 = vst.msk [vmem:[%s332 + $0xe0] sm:$0xff] %vm370, %v2034
      %2067 = vst.msk [vmem:[%s332 + $0xe8] sm:$0xff] %vm370, %v2035
      %2068 = vst.msk [vmem:[%s332 + $0xf0] sm:$0xff] %vm370, %v2036
      %2069 = vst.msk [vmem:[%s332 + $0xf8] sm:$0xff] %vm370, %v2037
      %p2070 = scmp.lt.s32.totalorder %s20, 1
      %s2071 = scalar_select %p2070, %s20, 1
      %s2072 = smul.addr %s2071, 32
      %s2073 = smul.addr %s2072, 8
      %s2074 = scalar_lea.vmem %s9, %s2073
      // Predicated region
      $region57: #{tpu_custom_call.1} parent=55 // pred_check
        %p2075 = pneg %p232
      $region58: #{tpu_custom_call.1} parent=55 // pred_check_branch
        %2077 = sbr.rel (%p2075) target = $region60
      $region59: #{tpu_custom_call.1} parent=55 // pred_region
        _
      $region60: #{tpu_custom_call.1} parent=55 // pred_fallthru
        _
    $region56: #{tpu_custom_call.1} parent=5 // pred_fallthru
      _
    %p2078 = scmp.le.s32.totalorder 2, %s15
    // Predicated region
    $region61: #{tpu_custom_call.1} parent=5 // pred_check
      %p2079 = pneg %p2078
    $region62: #{tpu_custom_call.1} parent=5 // pred_check_branch
      %2081 = sbr.rel (%p2079) target = $region64
    $region63: #{tpu_custom_call.1} parent=5 // pred_region
      %s2082 = ssub.s32 %s15, 2
      // Predicated region
      $region65: #{tpu_custom_call.1} parent=63 // pred_check
        %p2083 = pneg %p238
      $region66: #{tpu_custom_call.1} parent=63 // pred_check_branch
        %2085 = sbr.rel (%p2083) target = $region68
      $region67: #{tpu_custom_call.1} parent=63 // pred_region
        %p2086 = scmp.lt.s32.totalorder %s21, 1
        %s2087 = scalar_select %p2086, %s21, 1
        %s2088 = smul.addr %s2087, 32
        %s2089 = smul.addr %s2088, 8
        %s2090 = scalar_lea.vmem %s9, %s2089
      $region68: #{tpu_custom_call.1} parent=63 // pred_fallthru
        _
    $region64: #{tpu_custom_call.1} parent=5 // pred_fallthru
      _
  $region6: #{tpu_custom_call.1} parent=0 // loop_footer
    %s19 = sadd.s32 1, %s15
  $region7: #{tpu_custom_call.1} parent=0 // loop_footer_branch
    %14 = sbr.rel target = $region3
  $region8: #{tpu_custom_call.1} parent=0 // loop_exit
    _

</llo_original>
